<compile_context>
chip_gen: v5e
topology: v5e:2x2
jax: 0.10.0
libtpu: 0.0.40
codegen_flags: <defaults>
</compile_context>

<pallas_src>
import numpy as np
import jax
import jax.numpy as jnp
from jax import lax
from jax.experimental import pallas as pl
from jax.experimental.pallas import tpu as pltpu


def _bilinear_matrix_np(n_in, n_out):
    """Interp matrix matching F.interpolate(mode='bilinear', align_corners=False)."""
    dst = np.arange(n_out, dtype=np.float64)
    src = (dst + 0.5) * (n_in / n_out) - 0.5
    src = np.maximum(src, 0.0)
    i0 = np.clip(np.floor(src).astype(np.int64), 0, n_in - 1)
    frac = src - i0
    i1 = np.minimum(i0 + 1, n_in - 1)
    A = np.zeros((n_out, n_in), dtype=np.float32)
    rows = np.arange(n_out)
    A[rows, i0] += (1.0 - frac)
    A[rows, i1] += frac
    return A


def _make_disp_head_kernel(C, H, W, do_upsample):
    unroll = min(C, 8)

    def conv_sigmoid(x_ref, w_ref, b_ref, xpad_s):
        # In-kernel halo: zero the 1-pixel border of the scratch (every grid step,
        # for megacore correctness) and copy the unpadded x tile into the interior.
        zrow = jnp.zeros((C, 1, W + 2), jnp.float32)
        zcol = jnp.zeros((C, H + 2, 1), jnp.float32)
        xpad_s[:, 0:1, :] = zrow
        xpad_s[:, H + 1:H + 2, :] = zrow
        xpad_s[:, :, 0:1] = zcol
        xpad_s[:, :, W + 1:W + 2] = zcol
        xpad_s[:, 1:H + 1, 1:W + 1] = x_ref[0]

        def channel_body(c, acc):
            pp = xpad_s[c]                                  # (H+2, W+2), loaded once
            for t in range(9):                              # 9 taps, scalar weights
                dy, dx = divmod(t, 3)
                wv = w_ref[c * 9 + t]                       # scalar read from SMEM
                acc = acc + wv * pp[dy:dy + H, dx:dx + W]   # scalar-operand VPU mul
            return acc

        acc = lax.fori_loop(0, C, channel_body,
                            jnp.zeros((H, W), jnp.float32), unroll=unroll)
        return jax.nn.sigmoid(acc + b_ref[0])               # (H, W) f32

    if do_upsample:
        def kernel(x_ref, w_ref, b_ref, ah_ref, awt_ref, o_ref, xpad_s):
            y = conv_sigmoid(x_ref, w_ref, b_ref, xpad_s).astype(jnp.bfloat16)
            # Apply the interp matrix of the larger input dim first; bf16
            # operands, f32 accumulation on the MXU.
            if H >= W:
                t = jnp.dot(ah_ref[...], y, preferred_element_type=jnp.float32)
                out = jnp.dot(t.astype(jnp.bfloat16), awt_ref[...],
                              preferred_element_type=jnp.float32)
            else:
                t = jnp.dot(y, awt_ref[...], preferred_element_type=jnp.float32)
                out = jnp.dot(ah_ref[...], t.astype(jnp.bfloat16),
                              preferred_element_type=jnp.float32)
            o_ref[0, 0, :, :] = out.astype(o_ref.dtype)     # lane-dense full-width store
        return kernel

    def kernel(x_ref, w_ref, b_ref, o_ref, xpad_s):
        # No upsample: direct store of the conv+sigmoid result.  (If W < 128 this
        # is a masked store; acceptable since the 1-channel output is a tiny
        # fraction of this kernel's HBM traffic.)
        y = conv_sigmoid(x_ref, w_ref, b_ref, xpad_s)
        o_ref[0, 0, :, :] = y.astype(o_ref.dtype)
    return kernel


def disp_head_forward(x, weight, bias, scale):
    """x: (N, C, H, W); weight: (1, C, 3, 3); bias: (1,); scale: static python number."""
    N, C, H, W = x.shape
    do_up = scale > 1
    outH = int(H * scale) if do_up else H
    outW = int(W * scale) if do_up else W
    # Lane-dense output when upsampling: store a last dim that is a multiple of
    # 128 (zero columns baked into the column interp matrix), strip afterwards.
    outW_store = ((outW + 127) // 128) * 128 if do_up else outW

    x = x.astype(jnp.float32)
    w_flat = weight.reshape(-1).astype(jnp.float32)   # index = c*9 + dy*3 + dx
    b = bias.reshape(1).astype(jnp.float32)

    in_specs = [
        pl.BlockSpec((1, C, H, W), lambda n: (n, 0, 0, 0)),
        pl.BlockSpec(memory_space=pltpu.MemorySpace.SMEM),   # conv weights (scalars)
        pl.BlockSpec(memory_space=pltpu.MemorySpace.SMEM),   # bias (scalar)
    ]
    args = [x, w_flat, b]

    if do_up:
        ah = jnp.asarray(_bilinear_matrix_np(H, outH), dtype=jnp.bfloat16)   # (outH, H)
        awt_np = np.zeros((W, outW_store), np.float32)
        awt_np[:, :outW] = _bilinear_matrix_np(W, outW).T
        awt = jnp.asarray(awt_np, dtype=jnp.bfloat16)                        # (W, outW_store)
        in_specs += [pl.BlockSpec((outH, H), lambda n: (0, 0)),
                     pl.BlockSpec((W, outW_store), lambda n: (0, 0))]
        args += [ah, awt]

    # VMEM working-set estimate; raise the scoped limit only if the default
    # (16 MiB v5e / 32 MiB v6e,v7x) would be tight.
    vmem_need = 4 * (2 * C * H * W                 # double-buffered input block
                     + 2 * outH * outW_store       # double-buffered output block
                     + C * (H + 2) * (W + 2))      # halo scratch
    if do_up:
        vmem_need += 2 * 2 * (outH * H + W * outW_store)   # bf16 interp matrices (x2 buf)
    cp_kwargs = dict(dimension_semantics=("parallel",))
    if vmem_need > 12 * 2 ** 20:
        # TODO(synk): for very large feature maps on v7x (64 MiB physical VMEM), add an
        # H-tiled grid axis with a 2-row input halo instead of relying on this limit.
        cp_kwargs["vmem_limit_bytes"] = int(min(2 * vmem_need, 96 * 2 ** 20))

    out = pl.pallas_call(
        _make_disp_head_kernel(C, H, W, do_up),
        out_shape=jax.ShapeDtypeStruct((N, 1, outH, outW_store), jnp.float32),
        grid_spec=pltpu.PrefetchScalarGridSpec(
            num_scalar_prefetch=0,
            grid=(N,),
            in_specs=in_specs,
            out_specs=pl.BlockSpec((1, 1, outH, outW_store), lambda n: (n, 0, 0, 0)),
            scratch_shapes=[pltpu.VMEM((C, H + 2, W + 2), jnp.float32)],
        ),
        compiler_params=pltpu.CompilerParams(**cp_kwargs),
    )(*args)

    if outW_store != outW:
        out = out[..., :outW]
    return out


def disp_head_reference(x, weight, bias, scale):
    """Pure-JAX f32 reference for correctness check."""
    y = lax.conv_general_dilated(
        x.astype(jnp.float32), weight.astype(jnp.float32),
        window_strides=(1, 1), padding=((1, 1), (1, 1)),
        dimension_numbers=('NCHW', 'OIHW', 'NCHW'))
    y = jax.nn.sigmoid(y + bias.reshape(1, -1, 1, 1))
    if scale > 1:
        _, _, H, W = y.shape
        ah = jnp.asarray(_bilinear_matrix_np(H, int(H * scale)))
        aw = jnp.asarray(_bilinear_matrix_np(W, int(W * scale)))
        y = jnp.einsum('oh,nchw,pw->ncop', ah, y, aw,
                       precision=lax.Precision.HIGHEST)
    return y


if __name__ == "__main__":
    key = jax.random.PRNGKey(0)
    N, C, H, W = 2, 4, 16, 16          # input_dim = 4 (small synthetic config)

    kx, kw, kb = jax.random.split(key, 3)
    x = jax.random.normal(kx, (N, C, H, W), jnp.float32)
    fan_in = C * 3 * 3
    weight = jax.random.normal(kw, (1, C, 3, 3), jnp.float32) / np.sqrt(fan_in)
    bias = jax.random.normal(kb, (1,), jnp.float32) * 0.1

    # scale > 1 path (conv + sigmoid + bilinear x2 upsample; bf16 MXU matmuls,
    # so the tolerance is relaxed accordingly).
    scale = 2
    out = jax.block_until_ready(disp_head_forward(x, weight, bias, scale))
    ref = disp_head_reference(x, weight, bias, scale)
    assert out.shape == (N, 1, H * scale, W * scale), out.shape
    np.testing.assert_allclose(np.asarray(out), np.asarray(ref), atol=2e-2, rtol=2e-2)

    # scale == 1 path (conv + sigmoid only, all f32 -> tight tolerance).
    out1 = jax.block_until_ready(disp_head_forward(x, weight, bias, 1))
    ref1 = disp_head_reference(x, weight, bias, 1)
    assert out1.shape == (N, 1, H, W), out1.shape
    np.testing.assert_allclose(np.asarray(out1), np.asarray(ref1), atol=1e-4, rtol=1e-4)

    print("KERNEL_OK")
</pallas_src>

<mosaic_0001>
module attributes {stable_mosaic.version = 11 : i64} {
  func.func @kernel(%arg0: i32, %arg1: memref<1x4x16x16xf32, #tpu.memory_space<vmem>>, %arg2: memref<36xf32, #tpu.memory_space<smem>>, %arg3: memref<1xf32, #tpu.memory_space<smem>>, %arg4: memref<32x16xbf16, #tpu.memory_space<vmem>>, %arg5: memref<16x128xbf16, #tpu.memory_space<vmem>>, %arg6: memref<1x1x32x128xf32, #tpu.memory_space<vmem>>, %arg7: memref<4x18x18xf32, #tpu.memory_space<vmem>>) attributes {dimension_semantics = [#tpu.dimension_semantics<parallel>], iteration_bounds = array<i64: 2>, scalar_prefetch = 0 : i64, scratch_operands = 1 : i64, tpu.core_type = #tpu.core_type<tc>, window_params = [{transform_indices = @transform_0, window_bounds = array<i64: 1, 4, 16, 16>}, {transform_indices = @transform_1, window_bounds = array<i64: 36>}, {transform_indices = @transform_2, window_bounds = array<i64: 1>}, {pipeline_mode = #tpu.pipeline_mode<synchronous>, transform_indices = @transform_3, window_bounds = array<i64: 32, 16>}, {pipeline_mode = #tpu.pipeline_mode<synchronous>, transform_indices = @transform_4, window_bounds = array<i64: 16, 128>}, {transform_indices = @transform_5, window_bounds = array<i64: 1, 1, 32, 128>}]} {
    %cst = arith.constant 0.000000e+00 : f32
    %0 = vector.broadcast %cst : f32 to vector<4x1x18xf32>
    %cst_0 = arith.constant 0.000000e+00 : f32
    %1 = vector.broadcast %cst_0 : f32 to vector<4x18x1xf32>
    %c0 = arith.constant 0 : index
    %c0_1 = arith.constant 0 : index
    %c0_2 = arith.constant 0 : index
    %2 = vector.load %arg7[%c0, %c0_1, %c0_2] : memref<4x18x18xf32, #tpu.memory_space<vmem>>, vector<4x1x18xf32>
    tpu.vector_store %arg7[%c0, %c0_1, %c0_2], %0 {strides = array<i32>} : memref<4x18x18xf32, #tpu.memory_space<vmem>>, vector<4x1x18xf32>,
    %c0_3 = arith.constant 0 : index
    %c17 = arith.constant 17 : index
    %c0_4 = arith.constant 0 : index
    %3 = vector.load %arg7[%c0_3, %c17, %c0_4] : memref<4x18x18xf32, #tpu.memory_space<vmem>>, vector<4x1x18xf32>
    tpu.vector_store %arg7[%c0_3, %c17, %c0_4], %0 {strides = array<i32>} : memref<4x18x18xf32, #tpu.memory_space<vmem>>, vector<4x1x18xf32>,
    %c0_5 = arith.constant 0 : index
    %c0_6 = arith.constant 0 : index
    %c0_7 = arith.constant 0 : index
    %4 = vector.load %arg7[%c0_5, %c0_6, %c0_7] : memref<4x18x18xf32, #tpu.memory_space<vmem>>, vector<4x18x1xf32>
    tpu.vector_store %arg7[%c0_5, %c0_6, %c0_7], %1 {strides = array<i32>} : memref<4x18x18xf32, #tpu.memory_space<vmem>>, vector<4x18x1xf32>,
    %c0_8 = arith.constant 0 : index
    %c0_9 = arith.constant 0 : index
    %c17_10 = arith.constant 17 : index
    %5 = vector.load %arg7[%c0_8, %c0_9, %c17_10] : memref<4x18x18xf32, #tpu.memory_space<vmem>>, vector<4x18x1xf32>
    tpu.vector_store %arg7[%c0_8, %c0_9, %c17_10], %1 {strides = array<i32>} : memref<4x18x18xf32, #tpu.memory_space<vmem>>, vector<4x18x1xf32>,
    %c0_11 = arith.constant 0 : index
    %c0_12 = arith.constant 0 : index
    %c0_13 = arith.constant 0 : index
    %c0_14 = arith.constant 0 : index
    %6 = vector.load %arg1[%c0_11, %c0_12, %c0_13, %c0_14] : memref<1x4x16x16xf32, #tpu.memory_space<vmem>>, vector<1x4x16x16xf32>
    %7 = vector.shape_cast %6 : vector<1x4x16x16xf32> to vector<4x16x16xf32>
    %c0_15 = arith.constant 0 : index
    %c1 = arith.constant 1 : index
    %c1_16 = arith.constant 1 : index
    %8 = vector.load %arg7[%c0_15, %c1, %c1_16] : memref<4x18x18xf32, #tpu.memory_space<vmem>>, vector<4x16x16xf32>
    tpu.vector_store %arg7[%c0_15, %c1, %c1_16], %7 {strides = array<i32>} : memref<4x18x18xf32, #tpu.memory_space<vmem>>, vector<4x16x16xf32>,
    %cst_17 = arith.constant 0.000000e+00 : f32
    %9 = vector.broadcast %cst_17 : f32 to vector<16x16xf32>
    %c0_i32 = arith.constant 0 : i32
    %10 = arith.index_cast %c0_i32 : i32 to index
    %c0_18 = arith.constant 0 : index
    %c0_19 = arith.constant 0 : index
    %11 = vector.load %arg7[%10, %c0_18, %c0_19] : memref<4x18x18xf32, #tpu.memory_space<vmem>>, vector<1x18x18xf32>
    %12 = vector.shape_cast %11 : vector<1x18x18xf32> to vector<18x18xf32>
    %c9_i32 = arith.constant 9 : i32
    %13 = arith.muli %c0_i32, %c9_i32 : i32
    %c0_i32_20 = arith.constant 0 : i32
    %14 = arith.addi %13, %c0_i32_20 : i32
    %15 = arith.index_cast %14 : i32 to index
    %16 = memref.load %arg2[%15] : memref<36xf32, #tpu.memory_space<smem>>
    %17 = vector.extract_strided_slice %12 {offsets = [0, 0], sizes = [16, 16], strides = [1, 1]} : vector<18x18xf32> to vector<16x16xf32>
    %18 = vector.broadcast %16 : f32 to vector<16x16xf32>
    %19 = arith.mulf %18, %17 : vector<16x16xf32>
    %20 = arith.addf %9, %19 : vector<16x16xf32>
    %c9_i32_21 = arith.constant 9 : i32
    %21 = arith.muli %c0_i32, %c9_i32_21 : i32
    %c1_i32 = arith.constant 1 : i32
    %22 = arith.addi %21, %c1_i32 : i32
    %23 = arith.index_cast %22 : i32 to index
    %24 = memref.load %arg2[%23] : memref<36xf32, #tpu.memory_space<smem>>
    %25 = vector.extract_strided_slice %12 {offsets = [0, 1], sizes = [16, 16], strides = [1, 1]} : vector<18x18xf32> to vector<16x16xf32>
    %26 = vector.broadcast %24 : f32 to vector<16x16xf32>
    %27 = arith.mulf %26, %25 : vector<16x16xf32>
    %28 = arith.addf %20, %27 : vector<16x16xf32>
    %c9_i32_22 = arith.constant 9 : i32
    %29 = arith.muli %c0_i32, %c9_i32_22 : i32
    %c2_i32 = arith.constant 2 : i32
    %30 = arith.addi %29, %c2_i32 : i32
    %31 = arith.index_cast %30 : i32 to index
    %32 = memref.load %arg2[%31] : memref<36xf32, #tpu.memory_space<smem>>
    %33 = vector.extract_strided_slice %12 {offsets = [0, 2], sizes = [16, 16], strides = [1, 1]} : vector<18x18xf32> to vector<16x16xf32>
    %34 = vector.broadcast %32 : f32 to vector<16x16xf32>
    %35 = arith.mulf %34, %33 : vector<16x16xf32>
    %36 = arith.addf %28, %35 : vector<16x16xf32>
    %c9_i32_23 = arith.constant 9 : i32
    %37 = arith.muli %c0_i32, %c9_i32_23 : i32
    %c3_i32 = arith.constant 3 : i32
    %38 = arith.addi %37, %c3_i32 : i32
    %39 = arith.index_cast %38 : i32 to index
    %40 = memref.load %arg2[%39] : memref<36xf32, #tpu.memory_space<smem>>
    %41 = vector.extract_strided_slice %12 {offsets = [1, 0], sizes = [16, 16], strides = [1, 1]} : vector<18x18xf32> to vector<16x16xf32>
    %42 = vector.broadcast %40 : f32 to vector<16x16xf32>
    %43 = arith.mulf %42, %41 : vector<16x16xf32>
    %44 = arith.addf %36, %43 : vector<16x16xf32>
    %c9_i32_24 = arith.constant 9 : i32
    %45 = arith.muli %c0_i32, %c9_i32_24 : i32
    %c4_i32 = arith.constant 4 : i32
    %46 = arith.addi %45, %c4_i32 : i32
    %47 = arith.index_cast %46 : i32 to index
    %48 = memref.load %arg2[%47] : memref<36xf32, #tpu.memory_space<smem>>
    %49 = vector.extract_strided_slice %12 {offsets = [1, 1], sizes = [16, 16], strides = [1, 1]} : vector<18x18xf32> to vector<16x16xf32>
    %50 = vector.broadcast %48 : f32 to vector<16x16xf32>
    %51 = arith.mulf %50, %49 : vector<16x16xf32>
    %52 = arith.addf %44, %51 : vector<16x16xf32>
    %c9_i32_25 = arith.constant 9 : i32
    %53 = arith.muli %c0_i32, %c9_i32_25 : i32
    %c5_i32 = arith.constant 5 : i32
    %54 = arith.addi %53, %c5_i32 : i32
    %55 = arith.index_cast %54 : i32 to index
    %56 = memref.load %arg2[%55] : memref<36xf32, #tpu.memory_space<smem>>
    %57 = vector.extract_strided_slice %12 {offsets = [1, 2], sizes = [16, 16], strides = [1, 1]} : vector<18x18xf32> to vector<16x16xf32>
    %58 = vector.broadcast %56 : f32 to vector<16x16xf32>
    %59 = arith.mulf %58, %57 : vector<16x16xf32>
    %60 = arith.addf %52, %59 : vector<16x16xf32>
    %c9_i32_26 = arith.constant 9 : i32
    %61 = arith.muli %c0_i32, %c9_i32_26 : i32
    %c6_i32 = arith.constant 6 : i32
    %62 = arith.addi %61, %c6_i32 : i32
    %63 = arith.index_cast %62 : i32 to index
    %64 = memref.load %arg2[%63] : memref<36xf32, #tpu.memory_space<smem>>
    %65 = vector.extract_strided_slice %12 {offsets = [2, 0], sizes = [16, 16], strides = [1, 1]} : vector<18x18xf32> to vector<16x16xf32>
    %66 = vector.broadcast %64 : f32 to vector<16x16xf32>
    %67 = arith.mulf %66, %65 : vector<16x16xf32>
    %68 = arith.addf %60, %67 : vector<16x16xf32>
    %c9_i32_27 = arith.constant 9 : i32
    %69 = arith.muli %c0_i32, %c9_i32_27 : i32
    %c7_i32 = arith.constant 7 : i32
    %70 = arith.addi %69, %c7_i32 : i32
    %71 = arith.index_cast %70 : i32 to index
    %72 = memref.load %arg2[%71] : memref<36xf32, #tpu.memory_space<smem>>
    %73 = vector.extract_strided_slice %12 {offsets = [2, 1], sizes = [16, 16], strides = [1, 1]} : vector<18x18xf32> to vector<16x16xf32>
    %74 = vector.broadcast %72 : f32 to vector<16x16xf32>
    %75 = arith.mulf %74, %73 : vector<16x16xf32>
    %76 = arith.addf %68, %75 : vector<16x16xf32>
    %c9_i32_28 = arith.constant 9 : i32
    %77 = arith.muli %c0_i32, %c9_i32_28 : i32
    %c8_i32 = arith.constant 8 : i32
    %78 = arith.addi %77, %c8_i32 : i32
    %79 = arith.index_cast %78 : i32 to index
    %80 = memref.load %arg2[%79] : memref<36xf32, #tpu.memory_space<smem>>
    %81 = vector.extract_strided_slice %12 {offsets = [2, 2], sizes = [16, 16], strides = [1, 1]} : vector<18x18xf32> to vector<16x16xf32>
    %82 = vector.broadcast %80 : f32 to vector<16x16xf32>
    %83 = arith.mulf %82, %81 : vector<16x16xf32>
    %84 = arith.addf %76, %83 : vector<16x16xf32>
    %c1_i32_29 = arith.constant 1 : i32
    %85 = arith.index_cast %c1_i32_29 : i32 to index
    %c0_30 = arith.constant 0 : index
    %c0_31 = arith.constant 0 : index
    %86 = vector.load %arg7[%85, %c0_30, %c0_31] : memref<4x18x18xf32, #tpu.memory_space<vmem>>, vector<1x18x18xf32>
    %87 = vector.shape_cast %86 : vector<1x18x18xf32> to vector<18x18xf32>
    %c9_i32_32 = arith.constant 9 : i32
    %88 = arith.muli %c1_i32_29, %c9_i32_32 : i32
    %c0_i32_33 = arith.constant 0 : i32
    %89 = arith.addi %88, %c0_i32_33 : i32
    %90 = arith.index_cast %89 : i32 to index
    %91 = memref.load %arg2[%90] : memref<36xf32, #tpu.memory_space<smem>>
    %92 = vector.extract_strided_slice %87 {offsets = [0, 0], sizes = [16, 16], strides = [1, 1]} : vector<18x18xf32> to vector<16x16xf32>
    %93 = vector.broadcast %91 : f32 to vector<16x16xf32>
    %94 = arith.mulf %93, %92 : vector<16x16xf32>
    %95 = arith.addf %84, %94 : vector<16x16xf32>
    %c9_i32_34 = arith.constant 9 : i32
    %96 = arith.muli %c1_i32_29, %c9_i32_34 : i32
    %c1_i32_35 = arith.constant 1 : i32
    %97 = arith.addi %96, %c1_i32_35 : i32
    %98 = arith.index_cast %97 : i32 to index
    %99 = memref.load %arg2[%98] : memref<36xf32, #tpu.memory_space<smem>>
    %100 = vector.extract_strided_slice %87 {offsets = [0, 1], sizes = [16, 16], strides = [1, 1]} : vector<18x18xf32> to vector<16x16xf32>
    %101 = vector.broadcast %99 : f32 to vector<16x16xf32>
    %102 = arith.mulf %101, %100 : vector<16x16xf32>
    %103 = arith.addf %95, %102 : vector<16x16xf32>
    %c9_i32_36 = arith.constant 9 : i32
    %104 = arith.muli %c1_i32_29, %c9_i32_36 : i32
    %c2_i32_37 = arith.constant 2 : i32
    %105 = arith.addi %104, %c2_i32_37 : i32
    %106 = arith.index_cast %105 : i32 to index
    %107 = memref.load %arg2[%106] : memref<36xf32, #tpu.memory_space<smem>>
    %108 = vector.extract_strided_slice %87 {offsets = [0, 2], sizes = [16, 16], strides = [1, 1]} : vector<18x18xf32> to vector<16x16xf32>
    %109 = vector.broadcast %107 : f32 to vector<16x16xf32>
    %110 = arith.mulf %109, %108 : vector<16x16xf32>
    %111 = arith.addf %103, %110 : vector<16x16xf32>
    %c9_i32_38 = arith.constant 9 : i32
    %112 = arith.muli %c1_i32_29, %c9_i32_38 : i32
    %c3_i32_39 = arith.constant 3 : i32
    %113 = arith.addi %112, %c3_i32_39 : i32
    %114 = arith.index_cast %113 : i32 to index
    %115 = memref.load %arg2[%114] : memref<36xf32, #tpu.memory_space<smem>>
    %116 = vector.extract_strided_slice %87 {offsets = [1, 0], sizes = [16, 16], strides = [1, 1]} : vector<18x18xf32> to vector<16x16xf32>
    %117 = vector.broadcast %115 : f32 to vector<16x16xf32>
    %118 = arith.mulf %117, %116 : vector<16x16xf32>
    %119 = arith.addf %111, %118 : vector<16x16xf32>
    %c9_i32_40 = arith.constant 9 : i32
    %120 = arith.muli %c1_i32_29, %c9_i32_40 : i32
    %c4_i32_41 = arith.constant 4 : i32
    %121 = arith.addi %120, %c4_i32_41 : i32
    %122 = arith.index_cast %121 : i32 to index
    %123 = memref.load %arg2[%122] : memref<36xf32, #tpu.memory_space<smem>>
    %124 = vector.extract_strided_slice %87 {offsets = [1, 1], sizes = [16, 16], strides = [1, 1]} : vector<18x18xf32> to vector<16x16xf32>
    %125 = vector.broadcast %123 : f32 to vector<16x16xf32>
    %126 = arith.mulf %125, %124 : vector<16x16xf32>
    %127 = arith.addf %119, %126 : vector<16x16xf32>
    %c9_i32_42 = arith.constant 9 : i32
    %128 = arith.muli %c1_i32_29, %c9_i32_42 : i32
    %c5_i32_43 = arith.constant 5 : i32
    %129 = arith.addi %128, %c5_i32_43 : i32
    %130 = arith.index_cast %129 : i32 to index
    %131 = memref.load %arg2[%130] : memref<36xf32, #tpu.memory_space<smem>>
    %132 = vector.extract_strided_slice %87 {offsets = [1, 2], sizes = [16, 16], strides = [1, 1]} : vector<18x18xf32> to vector<16x16xf32>
    %133 = vector.broadcast %131 : f32 to vector<16x16xf32>
    %134 = arith.mulf %133, %132 : vector<16x16xf32>
    %135 = arith.addf %127, %134 : vector<16x16xf32>
    %c9_i32_44 = arith.constant 9 : i32
    %136 = arith.muli %c1_i32_29, %c9_i32_44 : i32
    %c6_i32_45 = arith.constant 6 : i32
    %137 = arith.addi %136, %c6_i32_45 : i32
    %138 = arith.index_cast %137 : i32 to index
    %139 = memref.load %arg2[%138] : memref<36xf32, #tpu.memory_space<smem>>
    %140 = vector.extract_strided_slice %87 {offsets = [2, 0], sizes = [16, 16], strides = [1, 1]} : vector<18x18xf32> to vector<16x16xf32>
    %141 = vector.broadcast %139 : f32 to vector<16x16xf32>
    %142 = arith.mulf %141, %140 : vector<16x16xf32>
    %143 = arith.addf %135, %142 : vector<16x16xf32>
    %c9_i32_46 = arith.constant 9 : i32
    %144 = arith.muli %c1_i32_29, %c9_i32_46 : i32
    %c7_i32_47 = arith.constant 7 : i32
    %145 = arith.addi %144, %c7_i32_47 : i32
    %146 = arith.index_cast %145 : i32 to index
    %147 = memref.load %arg2[%146] : memref<36xf32, #tpu.memory_space<smem>>
    %148 = vector.extract_strided_slice %87 {offsets = [2, 1], sizes = [16, 16], strides = [1, 1]} : vector<18x18xf32> to vector<16x16xf32>
    %149 = vector.broadcast %147 : f32 to vector<16x16xf32>
    %150 = arith.mulf %149, %148 : vector<16x16xf32>
    %151 = arith.addf %143, %150 : vector<16x16xf32>
    %c9_i32_48 = arith.constant 9 : i32
    %152 = arith.muli %c1_i32_29, %c9_i32_48 : i32
    %c8_i32_49 = arith.constant 8 : i32
    %153 = arith.addi %152, %c8_i32_49 : i32
    %154 = arith.index_cast %153 : i32 to index
    %155 = memref.load %arg2[%154] : memref<36xf32, #tpu.memory_space<smem>>
    %156 = vector.extract_strided_slice %87 {offsets = [2, 2], sizes = [16, 16], strides = [1, 1]} : vector<18x18xf32> to vector<16x16xf32>
    %157 = vector.broadcast %155 : f32 to vector<16x16xf32>
    %158 = arith.mulf %157, %156 : vector<16x16xf32>
    %159 = arith.addf %151, %158 : vector<16x16xf32>
    %c2_i32_50 = arith.constant 2 : i32
    %160 = arith.index_cast %c2_i32_50 : i32 to index
    %c0_51 = arith.constant 0 : index
    %c0_52 = arith.constant 0 : index
    %161 = vector.load %arg7[%160, %c0_51, %c0_52] : memref<4x18x18xf32, #tpu.memory_space<vmem>>, vector<1x18x18xf32>
    %162 = vector.shape_cast %161 : vector<1x18x18xf32> to vector<18x18xf32>
    %c9_i32_53 = arith.constant 9 : i32
    %163 = arith.muli %c2_i32_50, %c9_i32_53 : i32
    %c0_i32_54 = arith.constant 0 : i32
    %164 = arith.addi %163, %c0_i32_54 : i32
    %165 = arith.index_cast %164 : i32 to index
    %166 = memref.load %arg2[%165] : memref<36xf32, #tpu.memory_space<smem>>
    %167 = vector.extract_strided_slice %162 {offsets = [0, 0], sizes = [16, 16], strides = [1, 1]} : vector<18x18xf32> to vector<16x16xf32>
    %168 = vector.broadcast %166 : f32 to vector<16x16xf32>
    %169 = arith.mulf %168, %167 : vector<16x16xf32>
    %170 = arith.addf %159, %169 : vector<16x16xf32>
    %c9_i32_55 = arith.constant 9 : i32
    %171 = arith.muli %c2_i32_50, %c9_i32_55 : i32
    %c1_i32_56 = arith.constant 1 : i32
    %172 = arith.addi %171, %c1_i32_56 : i32
    %173 = arith.index_cast %172 : i32 to index
    %174 = memref.load %arg2[%173] : memref<36xf32, #tpu.memory_space<smem>>
    %175 = vector.extract_strided_slice %162 {offsets = [0, 1], sizes = [16, 16], strides = [1, 1]} : vector<18x18xf32> to vector<16x16xf32>
    %176 = vector.broadcast %174 : f32 to vector<16x16xf32>
    %177 = arith.mulf %176, %175 : vector<16x16xf32>
    %178 = arith.addf %170, %177 : vector<16x16xf32>
    %c9_i32_57 = arith.constant 9 : i32
    %179 = arith.muli %c2_i32_50, %c9_i32_57 : i32
    %c2_i32_58 = arith.constant 2 : i32
    %180 = arith.addi %179, %c2_i32_58 : i32
    %181 = arith.index_cast %180 : i32 to index
    %182 = memref.load %arg2[%181] : memref<36xf32, #tpu.memory_space<smem>>
    %183 = vector.extract_strided_slice %162 {offsets = [0, 2], sizes = [16, 16], strides = [1, 1]} : vector<18x18xf32> to vector<16x16xf32>
    %184 = vector.broadcast %182 : f32 to vector<16x16xf32>
    %185 = arith.mulf %184, %183 : vector<16x16xf32>
    %186 = arith.addf %178, %185 : vector<16x16xf32>
    %c9_i32_59 = arith.constant 9 : i32
    %187 = arith.muli %c2_i32_50, %c9_i32_59 : i32
    %c3_i32_60 = arith.constant 3 : i32
    %188 = arith.addi %187, %c3_i32_60 : i32
    %189 = arith.index_cast %188 : i32 to index
    %190 = memref.load %arg2[%189] : memref<36xf32, #tpu.memory_space<smem>>
    %191 = vector.extract_strided_slice %162 {offsets = [1, 0], sizes = [16, 16], strides = [1, 1]} : vector<18x18xf32> to vector<16x16xf32>
    %192 = vector.broadcast %190 : f32 to vector<16x16xf32>
    %193 = arith.mulf %192, %191 : vector<16x16xf32>
    %194 = arith.addf %186, %193 : vector<16x16xf32>
    %c9_i32_61 = arith.constant 9 : i32
    %195 = arith.muli %c2_i32_50, %c9_i32_61 : i32
    %c4_i32_62 = arith.constant 4 : i32
    %196 = arith.addi %195, %c4_i32_62 : i32
    %197 = arith.index_cast %196 : i32 to index
    %198 = memref.load %arg2[%197] : memref<36xf32, #tpu.memory_space<smem>>
    %199 = vector.extract_strided_slice %162 {offsets = [1, 1], sizes = [16, 16], strides = [1, 1]} : vector<18x18xf32> to vector<16x16xf32>
    %200 = vector.broadcast %198 : f32 to vector<16x16xf32>
    %201 = arith.mulf %200, %199 : vector<16x16xf32>
    %202 = arith.addf %194, %201 : vector<16x16xf32>
    %c9_i32_63 = arith.constant 9 : i32
    %203 = arith.muli %c2_i32_50, %c9_i32_63 : i32
    %c5_i32_64 = arith.constant 5 : i32
    %204 = arith.addi %203, %c5_i32_64 : i32
    %205 = arith.index_cast %204 : i32 to index
    %206 = memref.load %arg2[%205] : memref<36xf32, #tpu.memory_space<smem>>
    %207 = vector.extract_strided_slice %162 {offsets = [1, 2], sizes = [16, 16], strides = [1, 1]} : vector<18x18xf32> to vector<16x16xf32>
    %208 = vector.broadcast %206 : f32 to vector<16x16xf32>
    %209 = arith.mulf %208, %207 : vector<16x16xf32>
    %210 = arith.addf %202, %209 : vector<16x16xf32>
    %c9_i32_65 = arith.constant 9 : i32
    %211 = arith.muli %c2_i32_50, %c9_i32_65 : i32
    %c6_i32_66 = arith.constant 6 : i32
    %212 = arith.addi %211, %c6_i32_66 : i32
    %213 = arith.index_cast %212 : i32 to index
    %214 = memref.load %arg2[%213] : memref<36xf32, #tpu.memory_space<smem>>
    %215 = vector.extract_strided_slice %162 {offsets = [2, 0], sizes = [16, 16], strides = [1, 1]} : vector<18x18xf32> to vector<16x16xf32>
    %216 = vector.broadcast %214 : f32 to vector<16x16xf32>
    %217 = arith.mulf %216, %215 : vector<16x16xf32>
    %218 = arith.addf %210, %217 : vector<16x16xf32>
    %c9_i32_67 = arith.constant 9 : i32
    %219 = arith.muli %c2_i32_50, %c9_i32_67 : i32
    %c7_i32_68 = arith.constant 7 : i32
    %220 = arith.addi %219, %c7_i32_68 : i32
    %221 = arith.index_cast %220 : i32 to index
    %222 = memref.load %arg2[%221] : memref<36xf32, #tpu.memory_space<smem>>
    %223 = vector.extract_strided_slice %162 {offsets = [2, 1], sizes = [16, 16], strides = [1, 1]} : vector<18x18xf32> to vector<16x16xf32>
    %224 = vector.broadcast %222 : f32 to vector<16x16xf32>
    %225 = arith.mulf %224, %223 : vector<16x16xf32>
    %226 = arith.addf %218, %225 : vector<16x16xf32>
    %c9_i32_69 = arith.constant 9 : i32
    %227 = arith.muli %c2_i32_50, %c9_i32_69 : i32
    %c8_i32_70 = arith.constant 8 : i32
    %228 = arith.addi %227, %c8_i32_70 : i32
    %229 = arith.index_cast %228 : i32 to index
    %230 = memref.load %arg2[%229] : memref<36xf32, #tpu.memory_space<smem>>
    %231 = vector.extract_strided_slice %162 {offsets = [2, 2], sizes = [16, 16], strides = [1, 1]} : vector<18x18xf32> to vector<16x16xf32>
    %232 = vector.broadcast %230 : f32 to vector<16x16xf32>
    %233 = arith.mulf %232, %231 : vector<16x16xf32>
    %234 = arith.addf %226, %233 : vector<16x16xf32>
    %c3_i32_71 = arith.constant 3 : i32
    %235 = arith.index_cast %c3_i32_71 : i32 to index
    %c0_72 = arith.constant 0 : index
    %c0_73 = arith.constant 0 : index
    %236 = vector.load %arg7[%235, %c0_72, %c0_73] : memref<4x18x18xf32, #tpu.memory_space<vmem>>, vector<1x18x18xf32>
    %237 = vector.shape_cast %236 : vector<1x18x18xf32> to vector<18x18xf32>
    %c9_i32_74 = arith.constant 9 : i32
    %238 = arith.muli %c3_i32_71, %c9_i32_74 : i32
    %c0_i32_75 = arith.constant 0 : i32
    %239 = arith.addi %238, %c0_i32_75 : i32
    %240 = arith.index_cast %239 : i32 to index
    %241 = memref.load %arg2[%240] : memref<36xf32, #tpu.memory_space<smem>>
    %242 = vector.extract_strided_slice %237 {offsets = [0, 0], sizes = [16, 16], strides = [1, 1]} : vector<18x18xf32> to vector<16x16xf32>
    %243 = vector.broadcast %241 : f32 to vector<16x16xf32>
    %244 = arith.mulf %243, %242 : vector<16x16xf32>
    %245 = arith.addf %234, %244 : vector<16x16xf32>
    %c9_i32_76 = arith.constant 9 : i32
    %246 = arith.muli %c3_i32_71, %c9_i32_76 : i32
    %c1_i32_77 = arith.constant 1 : i32
    %247 = arith.addi %246, %c1_i32_77 : i32
    %248 = arith.index_cast %247 : i32 to index
    %249 = memref.load %arg2[%248] : memref<36xf32, #tpu.memory_space<smem>>
    %250 = vector.extract_strided_slice %237 {offsets = [0, 1], sizes = [16, 16], strides = [1, 1]} : vector<18x18xf32> to vector<16x16xf32>
    %251 = vector.broadcast %249 : f32 to vector<16x16xf32>
    %252 = arith.mulf %251, %250 : vector<16x16xf32>
    %253 = arith.addf %245, %252 : vector<16x16xf32>
    %c9_i32_78 = arith.constant 9 : i32
    %254 = arith.muli %c3_i32_71, %c9_i32_78 : i32
    %c2_i32_79 = arith.constant 2 : i32
    %255 = arith.addi %254, %c2_i32_79 : i32
    %256 = arith.index_cast %255 : i32 to index
    %257 = memref.load %arg2[%256] : memref<36xf32, #tpu.memory_space<smem>>
    %258 = vector.extract_strided_slice %237 {offsets = [0, 2], sizes = [16, 16], strides = [1, 1]} : vector<18x18xf32> to vector<16x16xf32>
    %259 = vector.broadcast %257 : f32 to vector<16x16xf32>
    %260 = arith.mulf %259, %258 : vector<16x16xf32>
    %261 = arith.addf %253, %260 : vector<16x16xf32>
    %c9_i32_80 = arith.constant 9 : i32
    %262 = arith.muli %c3_i32_71, %c9_i32_80 : i32
    %c3_i32_81 = arith.constant 3 : i32
    %263 = arith.addi %262, %c3_i32_81 : i32
    %264 = arith.index_cast %263 : i32 to index
    %265 = memref.load %arg2[%264] : memref<36xf32, #tpu.memory_space<smem>>
    %266 = vector.extract_strided_slice %237 {offsets = [1, 0], sizes = [16, 16], strides = [1, 1]} : vector<18x18xf32> to vector<16x16xf32>
    %267 = vector.broadcast %265 : f32 to vector<16x16xf32>
    %268 = arith.mulf %267, %266 : vector<16x16xf32>
    %269 = arith.addf %261, %268 : vector<16x16xf32>
    %c9_i32_82 = arith.constant 9 : i32
    %270 = arith.muli %c3_i32_71, %c9_i32_82 : i32
    %c4_i32_83 = arith.constant 4 : i32
    %271 = arith.addi %270, %c4_i32_83 : i32
    %272 = arith.index_cast %271 : i32 to index
    %273 = memref.load %arg2[%272] : memref<36xf32, #tpu.memory_space<smem>>
    %274 = vector.extract_strided_slice %237 {offsets = [1, 1], sizes = [16, 16], strides = [1, 1]} : vector<18x18xf32> to vector<16x16xf32>
    %275 = vector.broadcast %273 : f32 to vector<16x16xf32>
    %276 = arith.mulf %275, %274 : vector<16x16xf32>
    %277 = arith.addf %269, %276 : vector<16x16xf32>
    %c9_i32_84 = arith.constant 9 : i32
    %278 = arith.muli %c3_i32_71, %c9_i32_84 : i32
    %c5_i32_85 = arith.constant 5 : i32
    %279 = arith.addi %278, %c5_i32_85 : i32
    %280 = arith.index_cast %279 : i32 to index
    %281 = memref.load %arg2[%280] : memref<36xf32, #tpu.memory_space<smem>>
    %282 = vector.extract_strided_slice %237 {offsets = [1, 2], sizes = [16, 16], strides = [1, 1]} : vector<18x18xf32> to vector<16x16xf32>
    %283 = vector.broadcast %281 : f32 to vector<16x16xf32>
    %284 = arith.mulf %283, %282 : vector<16x16xf32>
    %285 = arith.addf %277, %284 : vector<16x16xf32>
    %c9_i32_86 = arith.constant 9 : i32
    %286 = arith.muli %c3_i32_71, %c9_i32_86 : i32
    %c6_i32_87 = arith.constant 6 : i32
    %287 = arith.addi %286, %c6_i32_87 : i32
    %288 = arith.index_cast %287 : i32 to index
    %289 = memref.load %arg2[%288] : memref<36xf32, #tpu.memory_space<smem>>
    %290 = vector.extract_strided_slice %237 {offsets = [2, 0], sizes = [16, 16], strides = [1, 1]} : vector<18x18xf32> to vector<16x16xf32>
    %291 = vector.broadcast %289 : f32 to vector<16x16xf32>
    %292 = arith.mulf %291, %290 : vector<16x16xf32>
    %293 = arith.addf %285, %292 : vector<16x16xf32>
    %c9_i32_88 = arith.constant 9 : i32
    %294 = arith.muli %c3_i32_71, %c9_i32_88 : i32
    %c7_i32_89 = arith.constant 7 : i32
    %295 = arith.addi %294, %c7_i32_89 : i32
    %296 = arith.index_cast %295 : i32 to index
    %297 = memref.load %arg2[%296] : memref<36xf32, #tpu.memory_space<smem>>
    %298 = vector.extract_strided_slice %237 {offsets = [2, 1], sizes = [16, 16], strides = [1, 1]} : vector<18x18xf32> to vector<16x16xf32>
    %299 = vector.broadcast %297 : f32 to vector<16x16xf32>
    %300 = arith.mulf %299, %298 : vector<16x16xf32>
    %301 = arith.addf %293, %300 : vector<16x16xf32>
    %c9_i32_90 = arith.constant 9 : i32
    %302 = arith.muli %c3_i32_71, %c9_i32_90 : i32
    %c8_i32_91 = arith.constant 8 : i32
    %303 = arith.addi %302, %c8_i32_91 : i32
    %304 = arith.index_cast %303 : i32 to index
    %305 = memref.load %arg2[%304] : memref<36xf32, #tpu.memory_space<smem>>
    %306 = vector.extract_strided_slice %237 {offsets = [2, 2], sizes = [16, 16], strides = [1, 1]} : vector<18x18xf32> to vector<16x16xf32>
    %307 = vector.broadcast %305 : f32 to vector<16x16xf32>
    %308 = arith.mulf %307, %306 : vector<16x16xf32>
    %309 = arith.addf %301, %308 : vector<16x16xf32>
    %c4_i32_92 = arith.constant 4 : i32
    %c0_93 = arith.constant 0 : index
    %310 = memref.load %arg3[%c0_93] : memref<1xf32, #tpu.memory_space<smem>>
    %311 = vector.broadcast %310 : f32 to vector<16x16xf32>
    %312 = arith.addf %309, %311 : vector<16x16xf32>
    %313 = arith.negf %312 : vector<16x16xf32>
    %314 = math.exp %313 : vector<16x16xf32>
    %cst_94 = arith.constant 1.000000e+00 : f32
    %315 = vector.broadcast %cst_94 : f32 to vector<16x16xf32>
    %316 = arith.addf %315, %314 : vector<16x16xf32>
    %317 = arith.divf %315, %316 : vector<16x16xf32>
    %318 = arith.truncf %317 : vector<16x16xf32> to vector<16x16xbf16>
    %c0_95 = arith.constant 0 : index
    %c0_96 = arith.constant 0 : index
    %319 = vector.load %arg4[%c0_95, %c0_96] : memref<32x16xbf16, #tpu.memory_space<vmem>>, vector<32x16xbf16>
    %cst_97 = arith.constant dense<0.000000e+00> : vector<32x16xf32>
    %320 = tpu.matmul %319, %318, %cst_97 {dimension_numbers = #tpu.dot_dimension_numbers<[1], [0], [0], [1], [0, 0, 1, 1], [], []>} : vector<32x16xbf16>, vector<16x16xbf16>, vector<32x16xf32> -> vector<32x16xf32>
    %321 = arith.truncf %320 : vector<32x16xf32> to vector<32x16xbf16>
    %c0_98 = arith.constant 0 : index
    %c0_99 = arith.constant 0 : index
    %322 = vector.load %arg5[%c0_98, %c0_99] : memref<16x128xbf16, #tpu.memory_space<vmem>>, vector<16x128xbf16>
    %cst_100 = arith.constant dense<0.000000e+00> : vector<32x128xf32>
    %323 = tpu.matmul %321, %322, %cst_100 {dimension_numbers = #tpu.dot_dimension_numbers<[1], [0], [0], [1], [0, 0, 1, 1], [], []>} : vector<32x16xbf16>, vector<16x128xbf16>, vector<32x128xf32> -> vector<32x128xf32>
    %c0_101 = arith.constant 0 : index
    %c0_102 = arith.constant 0 : index
    %c0_103 = arith.constant 0 : index
    %c0_104 = arith.constant 0 : index
    %324 = vector.load %arg6[%c0_101, %c0_102, %c0_103, %c0_104] : memref<1x1x32x128xf32, #tpu.memory_space<vmem>>, vector<1x1x32x128xf32>
    %325 = vector.shape_cast %324 : vector<1x1x32x128xf32> to vector<32x128xf32>
    %326 = vector.shape_cast %323 : vector<32x128xf32> to vector<1x1x32x128xf32>
    tpu.vector_store %arg6[%c0_101, %c0_102, %c0_103, %c0_104], %326 {strides = array<i32>} : memref<1x1x32x128xf32, #tpu.memory_space<vmem>>, vector<1x1x32x128xf32>,
    return
  }
  func.func @transform_0(%arg0: i32) -> (i32, i32, i32, i32) {
    %c0_i32 = arith.constant 0 : i32
    %c0_i32_0 = arith.constant 0 : i32
    %c0_i32_1 = arith.constant 0 : i32
    %c0_i32_2 = arith.constant 0 : i32
    return %arg0, %c0_i32, %c0_i32_0, %c0_i32_1 : i32, i32, i32, i32
  }
  func.func @transform_1(%arg0: i32) -> i32 {
    %c0_i32 = arith.constant 0 : i32
    %c0_i32_0 = arith.constant 0 : i32
    return %c0_i32 : i32
  }
  func.func @transform_2(%arg0: i32) -> i32 {
    %c0_i32 = arith.constant 0 : i32
    %c0_i32_0 = arith.constant 0 : i32
    return %c0_i32 : i32
  }
  func.func @transform_3(%arg0: i32) -> (i32, i32) {
    %c0_i32 = arith.constant 0 : i32
    %c0_i32_0 = arith.constant 0 : i32
    %c0_i32_1 = arith.constant 0 : i32
    return %c0_i32, %c0_i32_0 : i32, i32
  }
  func.func @transform_4(%arg0: i32) -> (i32, i32) {
    %c0_i32 = arith.constant 0 : i32
    %c0_i32_0 = arith.constant 0 : i32
    %c0_i32_1 = arith.constant 0 : i32
    return %c0_i32, %c0_i32_0 : i32, i32
  }
  func.func @transform_5(%arg0: i32) -> (i32, i32, i32, i32) {
    %c0_i32 = arith.constant 0 : i32
    %c0_i32_0 = arith.constant 0 : i32
    %c0_i32_1 = arith.constant 0 : i32
    %c0_i32_2 = arith.constant 0 : i32
    return %arg0, %c0_i32, %c0_i32_0, %c0_i32_1 : i32, i32, i32, i32
  }
}

</mosaic_0001>

<llo_original>
// kernel: tpu_custom_call.1
$region0: #{tpu_custom_call.1}
  #allocation0 [shape = 'u32[]', space=smem, size = 0x4, offset = 0x4, fixed_abs, tag = 'smem constant byte address 0x4 - core index']
  #allocation1 [shape = 'u32[72,128]{1,0:T(1,128)}', space=vmem, size = 0x9000, scoped, tag = 'internal scratch']
  #allocation2 [shape = 'f32[4,18,18]{2,1,0:T(8,128)}', space=vmem, size = 0xc000, scoped, tag = 'scratch operand']
  #allocation3 [shape = 'f32[1]{0:T(128)S(6)}', space=smem, size = 0x200, scoped, tag = 'scoped memory for tpu_custom_call.1']
  %s0 = inlined_call_operand.hbm [shape: f32[2,4,16,16], index: 0, kind: input, shape index: {}]
  %s1 = inlined_call_operand.vmem [shape: f32[36], index: 1, kind: input, shape index: {}]
  %s2 = inlined_call_operand.<no memory space> [shape: f32[1], index: 2, kind: input, shape index: {}]
  %s3 = inlined_call_operand.vmem [shape: bf16[32,16], index: 3, kind: input, shape index: {}]
  %s4 = inlined_call_operand.vmem [shape: bf16[16,128], index: 4, kind: input, shape index: {}]
  %s5 = inlined_call_operand.hbm [shape: f32[2,1,32,128], index: 5, kind: output, shape index: {}]
  %s6 = sld [smem:[#allocation0]]
  $region61: #{tpu_custom_call.1} parent=0
    _
  %s8 = ssub.s32 1, %s6
  %s9 = scalar_select 0, %s8, %s6
  %10 = sst [smem:[#allocation3]] %s2
  $region1: #{tpu_custom_call.1} parent=0
    #allocation4 [shape = 'u8[65536]{0}', space=vmem, size = 0x10000, scoped, tag = 'input window, operand 0']
    #allocation5 [shape = 's32[2]{0}', space=sflag, size = 0x8, scoped, tag = 'scoped memory for tpu_custom_call.1']
    #allocation6 [shape = 's32[2]{0}', space=sflag, size = 0x8, scoped, tag = 'scoped memory for tpu_custom_call.1']
    #allocation7 [shape = 's32[2]{0}', space=sflag, size = 0x8, scoped, tag = 'scoped memory for tpu_custom_call.1']
    #allocation8 [shape = 'u8[512]{0}', space=smem, size = 0x200, scoped, tag = 'input window, operand 1, single buffered']
    #allocation9 [shape = 'u8[32768]{0}', space=vmem, size = 0x8000, scoped, tag = 'output window, operand 0']
    %11 = vsyncpa [#allocation5], 0
    %s12 = scalar_lea.sflag [#allocation5], 1
    %13 = vsyncpa %s12, 0
    %14 = vsyncpa [#allocation7], 0
    %15 = vsyncpa [#allocation6], 0
    %s16 = scalar_lea.sflag [#allocation6], 1
    %17 = vsyncpa %s16, 0
    loop: start=0, step=1, limit=4
    $region2: #{tpu_custom_call.1} parent=1 // loop_pre_header
      _
    $region3: #{tpu_custom_call.1} parent=1 // loop_header
      %s19 = sphi 0, %s23
      %p20 = scmp.ge.s32.totalorder %s19, 4
      %s29 = sphi 0, %s31
      %s32 = sphi 0, %s29
      %s33 = sphi 0, %s32
      %s49 = sphi 0, %s33
      %s53 = sphi 0, %s53
      %s55 = sphi 0, %s53
      %s56 = sphi 0, %s55
      %s70 = sphi 0, %s56
      %s74 = sphi 0, %s74
      %s76 = sphi 0, %s74
      %s77 = sphi 0, %s76
      %s91 = sphi 0, %s77
      %s95 = sphi 0, %s95
      %s97 = sphi 0, %s95
      %s98 = sphi 0, %s97
      %s112 = sphi 0, %s98
      %s116 = sphi 0, %s116
      %s118 = sphi 0, %s116
      %s119 = sphi 0, %s118
      %s133 = sphi 0, %s119
      %s139 = sphi 0, %s141
      %s142 = sphi 0, %s139
      %s143 = sphi 0, %s142
      %s159 = sphi 0, %s143
    $region4: #{tpu_custom_call.1} parent=1 // loop_header_branch
      %22 = sbr.rel (%p20) target = $region8
    $region5: #{tpu_custom_call.1} parent=1 // loop_body
      %s24 = ssub.s32 %s19, 1
      %s25 = ssub.s32 %s19, 2
      %s26 = sadd.s32 %s19, 1
      %s27 = ssub.s32 %s19, %s26
      %p28 = scmp.eq.s32.totalorder %s27, 0
      %s30 = sadd.s32 %s29, 1
      %s31 = scalar_select %p28, %s29, %s30
      %p34 = pneg %p28
      %p35 = scmp.eq.s32.totalorder %s19, 1
      %p36 = por %p34, %p35
      %p37 = scmp.ne.s32.totalorder %s29, %s32
      %p38 = scmp.eq.s32.totalorder %s19, 0
      %p39 = por %p37, %p38
      %p40 = scmp.ne.s32.totalorder %s29, %s32
      %p41 = scmp.eq.s32.totalorder %s24, 1
      %p42 = por %p40, %p41
      %p43 = scmp.ne.s32.totalorder %s32, %s33
      %p44 = scmp.eq.s32.totalorder %s24, 0
      %p45 = por %p43, %p44
      %p46 = scmp.ne.s32.totalorder %s32, %s33
      %p47 = scmp.eq.s32.totalorder %s25, 1
      %p48 = por %p46, %p47
      %p50 = scmp.ne.s32.totalorder %s33, %s49
      %p51 = scmp.eq.s32.totalorder %s25, 0
      %p52 = por %p50, %p51
      %s54 = sadd.s32 %s53, 1
      %p57 = scmp.eq.s32.totalorder %s19, 1
      %p58 = scmp.ne.s32.totalorder %s53, %s55
      %p59 = scmp.eq.s32.totalorder %s19, 0
      %p60 = por %p58, %p59
      %p61 = scmp.ne.s32.totalorder %s53, %s55
      %p62 = scmp.eq.s32.totalorder %s24, 1
      %p63 = por %p61, %p62
      %p64 = scmp.ne.s32.totalorder %s55, %s56
      %p65 = scmp.eq.s32.totalorder %s24, 0
      %p66 = por %p64, %p65
      %p67 = scmp.ne.s32.totalorder %s55, %s56
      %p68 = scmp.eq.s32.totalorder %s25, 1
      %p69 = por %p67, %p68
      %p71 = scmp.ne.s32.totalorder %s56, %s70
      %p72 = scmp.eq.s32.totalorder %s25, 0
      %p73 = por %p71, %p72
      %s75 = sadd.s32 %s74, 1
      %p78 = scmp.eq.s32.totalorder %s19, 1
      %p79 = scmp.ne.s32.totalorder %s74, %s76
      %p80 = scmp.eq.s32.totalorder %s19, 0
      %p81 = por %p79, %p80
      %p82 = scmp.ne.s32.totalorder %s74, %s76
      %p83 = scmp.eq.s32.totalorder %s24, 1
      %p84 = por %p82, %p83
      %p85 = scmp.ne.s32.totalorder %s76, %s77
      %p86 = scmp.eq.s32.totalorder %s24, 0
      %p87 = por %p85, %p86
      %p88 = scmp.ne.s32.totalorder %s76, %s77
      %p89 = scmp.eq.s32.totalorder %s25, 1
      %p90 = por %p88, %p89
      %p92 = scmp.ne.s32.totalorder %s77, %s91
      %p93 = scmp.eq.s32.totalorder %s25, 0
      %p94 = por %p92, %p93
      %s96 = sadd.s32 %s95, 1
      %p99 = scmp.eq.s32.totalorder %s19, 1
      %p100 = scmp.ne.s32.totalorder %s95, %s97
      %p101 = scmp.eq.s32.totalorder %s19, 0
      %p102 = por %p100, %p101
      %p103 = scmp.ne.s32.totalorder %s95, %s97
      %p104 = scmp.eq.s32.totalorder %s24, 1
      %p105 = por %p103, %p104
      %p106 = scmp.ne.s32.totalorder %s97, %s98
      %p107 = scmp.eq.s32.totalorder %s24, 0
      %p108 = por %p106, %p107
      %p109 = scmp.ne.s32.totalorder %s97, %s98
      %p110 = scmp.eq.s32.totalorder %s25, 1
      %p111 = por %p109, %p110
      %p113 = scmp.ne.s32.totalorder %s98, %s112
      %p114 = scmp.eq.s32.totalorder %s25, 0
      %p115 = por %p113, %p114
      %s117 = sadd.s32 %s116, 1
      %p120 = scmp.eq.s32.totalorder %s19, 1
      %p121 = scmp.ne.s32.totalorder %s116, %s118
      %p122 = scmp.eq.s32.totalorder %s19, 0
      %p123 = por %p121, %p122
      %p124 = scmp.ne.s32.totalorder %s116, %s118
      %p125 = scmp.eq.s32.totalorder %s24, 1
      %p126 = por %p124, %p125
      %p127 = scmp.ne.s32.totalorder %s118, %s119
      %p128 = scmp.eq.s32.totalorder %s24, 0
      %p129 = por %p127, %p128
      %p130 = scmp.ne.s32.totalorder %s118, %s119
      %p131 = scmp.eq.s32.totalorder %s25, 1
      %p132 = por %p130, %p131
      %p134 = scmp.ne.s32.totalorder %s119, %s133
      %p135 = scmp.eq.s32.totalorder %s25, 0
      %p136 = por %p134, %p135
      %s137 = ssub.s32 %s19, %s26
      %p138 = scmp.eq.s32.totalorder %s137, 0
      %s140 = sadd.s32 %s139, 1
      %s141 = scalar_select %p138, %s139, %s140
      %p144 = pneg %p138
      %p145 = scmp.eq.s32.totalorder %s19, 1
      %p146 = por %p144, %p145
      %p147 = scmp.ne.s32.totalorder %s139, %s142
      %p148 = scmp.eq.s32.totalorder %s19, 0
      %p149 = por %p147, %p148
      %p150 = scmp.ne.s32.totalorder %s139, %s142
      %p151 = scmp.eq.s32.totalorder %s24, 1
      %p152 = por %p150, %p151
      %p153 = scmp.ne.s32.totalorder %s142, %s143
      %p154 = scmp.eq.s32.totalorder %s24, 0
      %p155 = por %p153, %p154
      %p156 = scmp.ne.s32.totalorder %s142, %s143
      %p157 = scmp.eq.s32.totalorder %s25, 1
      %p158 = por %p156, %p157
      %p160 = scmp.ne.s32.totalorder %s143, %s159
      %p161 = scmp.eq.s32.totalorder %s25, 0
      %p162 = por %p160, %p161
      %p163 = scmp.le.s32.totalorder 1, %s19
      %p164 = scmp.lt.s32.totalorder %s19, 3
      %p165 = pnand %p163, %p164
      %p166 = pneg %p165
      // Predicated region
      $region9: #{tpu_custom_call.1} parent=5 // pred_check
        _
      $region10: #{tpu_custom_call.1} parent=5 // pred_check_branch
        %168 = sbr.rel (%p165) target = $region12
      $region11: #{tpu_custom_call.1} parent=5 // pred_region
        %s169 = ssub.s32 %s19, 1
        // Predicated region
        $region13: #{tpu_custom_call.1} parent=11 // pred_check
          %p170 = pneg %p66
        $region14: #{tpu_custom_call.1} parent=11 // pred_check_branch
          %172 = sbr.rel (%p170) target = $region16
        $region15: #{tpu_custom_call.1} parent=11 // pred_region
          %174 = vsyncadd [#allocation7], 0
          %s176 = sshll.u32 %s1, 4
          %s177 = int_to_ptr.vmem [resolvable:$true] %s176
          %179 = dma.vmem_to_smem %s177, 16, [#allocation8], [#allocation7]
        $region16: #{tpu_custom_call.1} parent=11 // pred_fallthru
          _
        // Predicated region
        $region17: #{tpu_custom_call.1} parent=11 // pred_check
          %p180 = pneg %p87
        $region18: #{tpu_custom_call.1} parent=11 // pred_check_branch
          %182 = sbr.rel (%p180) target = $region20
        $region19: #{tpu_custom_call.1} parent=11 // pred_region
          _
        $region20: #{tpu_custom_call.1} parent=11 // pred_fallthru
          _
        // Predicated region
        $region21: #{tpu_custom_call.1} parent=11 // pred_check
          %p183 = pneg %p108
        $region22: #{tpu_custom_call.1} parent=11 // pred_check_branch
          %185 = sbr.rel (%p183) target = $region24
        $region23: #{tpu_custom_call.1} parent=11 // pred_region
          _
        $region24: #{tpu_custom_call.1} parent=11 // pred_fallthru
          _
        // Predicated region
        $region25: #{tpu_custom_call.1} parent=11 // pred_check
          %p186 = pneg %p129
        $region26: #{tpu_custom_call.1} parent=11 // pred_check_branch
          %188 = sbr.rel (%p186) target = $region28
        $region27: #{tpu_custom_call.1} parent=11 // pred_region
          _
        $region28: #{tpu_custom_call.1} parent=11 // pred_fallthru
          _
      $region12: #{tpu_custom_call.1} parent=5 // pred_fallthru
        _
      %p189 = scmp.lt.s32.totalorder %s19, 2
      // Predicated region
      $region29: #{tpu_custom_call.1} parent=5 // pred_check
        %p190 = pneg %p189
      $region30: #{tpu_custom_call.1} parent=5 // pred_check_branch
        %192 = sbr.rel (%p190) target = $region32
      $region31: #{tpu_custom_call.1} parent=5 // pred_region
        // Predicated region
        $region33: #{tpu_custom_call.1} parent=31 // pred_check
          %p193 = pneg %p39
        $region34: #{tpu_custom_call.1} parent=31 // pred_check_branch
          %195 = sbr.rel (%p193) target = $region36
        $region35: #{tpu_custom_call.1} parent=31 // pred_region
          %s196 = sand.u32 %s29, 1
          %s197 = scalar_lea.sflag [#allocation5], %s196
          %s198 = sand.u32 %s29, 1
          %s199 = smul.addr %s198, 64
          %s200 = scalar_lea.vmem [#allocation4], %s199
          %202 = vsyncadd %s197, 0
          %s203 = smul.addr %s19, 8
          %s204 = smul.addr %s203, 8
          %s205 = scalar_lea.hbm %s0, %s204
          %s206 = sshll.u32 %s205, 4
          %s207 = int_to_ptr.hbm [resolvable:$true] %s206
          %s208 = sshll.u32 %s200, 4
          %s209 = int_to_ptr.vmem [resolvable:$true] %s208
          %214 = dma.hbm_to_vmem [thread:$0]  %s207, 1024, %s209, %s197, 128, 128, 8
        $region36: #{tpu_custom_call.1} parent=31 // pred_fallthru
          _
      $region32: #{tpu_custom_call.1} parent=5 // pred_fallthru
        _
      %p215 = scmp.le.s32.totalorder 1, %s19
      %p216 = scmp.lt.s32.totalorder %s19, 3
      %p217 = pnand %p215, %p216
      %p218 = pneg %p217
      // Predicated region
      $region37: #{tpu_custom_call.1} parent=5 // pred_check
        _
      $region38: #{tpu_custom_call.1} parent=5 // pred_check_branch
        %220 = sbr.rel (%p217) target = $region40
      $region39: #{tpu_custom_call.1} parent=5 // pred_region
        %s221 = ssub.s32 %s19, 1
        %s222 = sand.u32 %s32, 1
        %s223 = scalar_lea.sflag [#allocation5], %s222
        %s224 = sand.u32 %s32, 1
        %s225 = smul.addr %s224, 64
        %s226 = scalar_lea.vmem [#allocation4], %s225
        // Predicated region
        $region41: #{tpu_custom_call.1} parent=39 // pred_check
          %p227 = pneg %p45
        $region42: #{tpu_custom_call.1} parent=39 // pred_check_branch
          %229 = sbr.rel (%p227) target = $region44
        $region43: #{tpu_custom_call.1} parent=39 // pred_region
          %231 = dma.done %s223, 1024
        $region44: #{tpu_custom_call.1} parent=39 // pred_fallthru
          _
        // Predicated region
        $region45: #{tpu_custom_call.1} parent=39 // pred_check
          %p232 = pneg %p66
        $region46: #{tpu_custom_call.1} parent=39 // pred_check_branch
          %234 = sbr.rel (%p232) target = $region48
        $region47: #{tpu_custom_call.1} parent=39 // pred_region
          %236 = dma.done [#allocation7], 16
        $region48: #{tpu_custom_call.1} parent=39 // pred_fallthru
          _
        %237 = sfence
        %s238 = sand.u32 %s32, 1
        %s239 = scalar_lea.sflag [#allocation5], %s238
        %s240 = sand.u32 %s32, 1
        %s241 = smul.addr %s240, 64
        %s242 = scalar_lea.vmem [#allocation4], %s241
        %p243 = pneg %p45
        %p244 = pneg %p42
        %p245 = pneg %p66
        %p246 = pneg %p63
        %p247 = pneg %p87
        %p248 = pneg %p84
        %p249 = pneg %p108
        %p250 = pneg %p105
        %p251 = pneg %p129
        %p252 = pneg %p126
        %p253 = pneg %p155
        %p254 = pneg %p152
        %s255 = sand.u32 %s142, 1
        %s256 = scalar_lea.sflag [#allocation6], %s255
        %s257 = sand.u32 %s142, 1
        %s258 = smul.addr %s257, 32
        %s259 = scalar_lea.vmem [#allocation9], %s258
        %vm261 = vcmask 139264
        %262 = vst.msk [vmem:[#allocation2] sm:$0x1] %vm261, 0.0
        %263 = vst.msk [vmem:[#allocation2 + $0x18] sm:$0x1] %vm261, 0.0
        %264 = vst.msk [vmem:[#allocation2 + $0x30] sm:$0x1] %vm261, 0.0
        %265 = vst.msk [vmem:[#allocation2 + $0x48] sm:$0x1] %vm261, 0.0
        %266 = vst.msk [vmem:[#allocation2 + $0x11] sm:$0x1] %vm261, 0.0
        %267 = vst.msk [vmem:[#allocation2 + $0x29] sm:$0x1] %vm261, 0.0
        %268 = vst.msk [vmem:[#allocation2 + $0x41] sm:$0x1] %vm261, 0.0
        %269 = vst.msk [vmem:[#allocation2 + $0x59] sm:$0x1] %vm261, 0.0
        %vm270 = vcmask 7168
        %271 = vst.msk [vmem:[#allocation2] sm:$0xff] %vm270, 0.0
        %272 = vst.msk [vmem:[#allocation2 + $0x8] sm:$0xff] %vm270, 0.0
        %vm273 = vcmask 1024
        %274 = vst.msk [vmem:[#allocation2 + $0x10] sm:$0x3] %vm273, 0.0
        %275 = vst.msk [vmem:[#allocation2 + $0x18] sm:$0xff] %vm270, 0.0
        %276 = vst.msk [vmem:[#allocation2 + $0x20] sm:$0xff] %vm270, 0.0
        %277 = vst.msk [vmem:[#allocation2 + $0x28] sm:$0x3] %vm273, 0.0
        %278 = vst.msk [vmem:[#allocation2 + $0x30] sm:$0xff] %vm270, 0.0
        %279 = vst.msk [vmem:[#allocation2 + $0x38] sm:$0xff] %vm270, 0.0
        %280 = vst.msk [vmem:[#allocation2 + $0x40] sm:$0x3] %vm273, 0.0
        %281 = vst.msk [vmem:[#allocation2 + $0x48] sm:$0xff] %vm270, 0.0
        %282 = vst.msk [vmem:[#allocation2 + $0x50] sm:$0xff] %vm270, 0.0
        %283 = vst.msk [vmem:[#allocation2 + $0x58] sm:$0x3] %vm273, 0.0
        %vm284 = vcmask 146568
        %285 = vst.msk [vmem:[#allocation2] sm:$0xff] %vm284, 0.0
        %286 = vst.msk [vmem:[#allocation2 + $0x8] sm:$0xff] %vm284, 0.0
        %vm287 = vcmask 140424
        %288 = vst.msk [vmem:[#allocation2 + $0x10] sm:$0x3] %vm287, 0.0
        %289 = vst.msk [vmem:[#allocation2 + $0x18] sm:$0xff] %vm284, 0.0
        %290 = vst.msk [vmem:[#allocation2 + $0x20] sm:$0xff] %vm284, 0.0
        %291 = vst.msk [vmem:[#allocation2 + $0x28] sm:$0x3] %vm287, 0.0
        %292 = vst.msk [vmem:[#allocation2 + $0x30] sm:$0xff] %vm284, 0.0
        %293 = vst.msk [vmem:[#allocation2 + $0x38] sm:$0xff] %vm284, 0.0
        %294 = vst.msk [vmem:[#allocation2 + $0x40] sm:$0x3] %vm287, 0.0
        %295 = vst.msk [vmem:[#allocation2 + $0x48] sm:$0xff] %vm284, 0.0
        %296 = vst.msk [vmem:[#allocation2 + $0x50] sm:$0xff] %vm284, 0.0
        %297 = vst.msk [vmem:[#allocation2 + $0x58] sm:$0x3] %vm287, 0.0
        %v298 = vld [vmem:[%s226] sm:$0xff]
        %v299 = vld [vmem:[%s226 + $0x8] sm:$0xff]
        %v300 = vld [vmem:[%s226 + $0x10] sm:$0xff]
        %v301 = vld [vmem:[%s226 + $0x18] sm:$0xff]
        %v302 = vld [vmem:[%s226 + $0x20] sm:$0xff]
        %v303 = vld [vmem:[%s226 + $0x28] sm:$0xff]
        %v304 = vld [vmem:[%s226 + $0x30] sm:$0xff]
        %v305 = vld [vmem:[%s226 + $0x38] sm:$0xff]
        %314 = vrot.lane.b32.xlu0 %v298, 1
        %v315 = vpop.permute.xlu0 %314
        %316 = vrot.lane.b32.xlu0 %v299, 1
        %v317 = vpop.permute.xlu0 %316
        %318 = vrot.lane.b32.xlu0 %v300, 1
        %v319 = vpop.permute.xlu0 %318
        %320 = vrot.lane.b32.xlu0 %v301, 1
        %v321 = vpop.permute.xlu0 %320
        %322 = vrot.lane.b32.xlu0 %v302, 1
        %v323 = vpop.permute.xlu0 %322
        %324 = vrot.lane.b32.xlu0 %v303, 1
        %v325 = vpop.permute.xlu0 %324
        %326 = vrot.lane.b32.xlu0 %v304, 1
        %v327 = vpop.permute.xlu0 %326
        %328 = vrot.lane.b32.xlu0 %v305, 1
        %v329 = vpop.permute.xlu0 %328
        %vm338 = vcmask 138248
        %339 = vst.msk [vmem:[#allocation2 + $0x1] sm:$0xff] %vm338, %v315
        %340 = vst.msk [vmem:[#allocation2 + $0x9] sm:$0xff] %vm338, %v317
        %341 = vst.msk [vmem:[#allocation2 + $0x19] sm:$0xff] %vm338, %v319
        %342 = vst.msk [vmem:[#allocation2 + $0x21] sm:$0xff] %vm338, %v321
        %343 = vst.msk [vmem:[#allocation2 + $0x31] sm:$0xff] %vm338, %v323
        %344 = vst.msk [vmem:[#allocation2 + $0x39] sm:$0xff] %vm338, %v325
        %345 = vst.msk [vmem:[#allocation2 + $0x49] sm:$0xff] %vm338, %v327
        %346 = vst.msk [vmem:[#allocation2 + $0x51] sm:$0xff] %vm338, %v329
        %v347 = vld [vmem:[#allocation2] sm:$0xff]
        %v348 = vld [vmem:[#allocation2 + $0x8] sm:$0xff]
        %v349 = vld [vmem:[#allocation2 + $0x10] sm:$0x3]
        %s350 = sld [smem:[#allocation8]]
        %v351 = vstv %s350
        %v352 = vmul.f32 %v351, %v347
        %v353 = vmul.f32 %v351, %v348
        %v354 = vadd.f32 %v352, 0.0
        %v355 = vadd.f32 %v353, 0.0
        %s356 = sld [smem:[#allocation8 + $0x1]]
        %v357 = vstv %s356
        %v358 = vmul.f32 %v357, %v347
        %v359 = vmul.f32 %v357, %v348
        %362 = vrot.lane.b32.xlu0 %v358, 127
        %v363 = vpop.permute.xlu0 %362
        %364 = vrot.lane.b32.xlu0 %v359, 127
        %v365 = vpop.permute.xlu0 %364
        %v368 = vadd.f32 %v354, %v363
        %v369 = vadd.f32 %v355, %v365
        %s370 = sld [smem:[#allocation8 + $0x2]]
        %v371 = vstv %s370
        %v372 = vmul.f32 %v371, %v347
        %v373 = vmul.f32 %v371, %v348
        %376 = vrot.lane.b32.xlu0 %v372, 126
        %v377 = vpop.permute.xlu0 %376
        %378 = vrot.lane.b32.xlu0 %v373, 126
        %v379 = vpop.permute.xlu0 %378
        %v382 = vadd.f32 %v368, %v377
        %v383 = vadd.f32 %v369, %v379
        %s384 = sld [smem:[#allocation8 + $0x3]]
        %v385 = vstv %s384
        %v386 = vmul.f32 %v385, %v347
        %v387 = vmul.f32 %v385, %v348
        %v388 = vmul.f32 %v385, %v349
        %vm392 = vcmask 1046528
        %v393 = vrot.slane %v386, 1
        %v394 = vrot.slane %v387, 1
        %v395 = vsel %vm392, %v393, %v394
        %v396 = vrot.slane %v388, 1
        %v397 = vsel %vm392, %v394, %v396
        %v400 = vadd.f32 %v382, %v395
        %v401 = vadd.f32 %v383, %v397
        %s402 = sld [smem:[#allocation8 + $0x4]]
        %v403 = vstv %s402
        %v404 = vmul.f32 %v403, %v347
        %v405 = vmul.f32 %v403, %v348
        %v406 = vmul.f32 %v403, %v349
        %v410 = vrot.slane %v404, 1
        %v411 = vrot.slane %v405, 1
        %v412 = vsel %vm392, %v410, %v411
        %v413 = vrot.slane %v406, 1
        %v414 = vsel %vm392, %v411, %v413
        %415 = vrot.lane.b32.xlu0 %v412, 127
        %v416 = vpop.permute.xlu0 %415
        %417 = vrot.lane.b32.xlu0 %v414, 127
        %v418 = vpop.permute.xlu0 %417
        %v421 = vadd.f32 %v400, %v416
        %v422 = vadd.f32 %v401, %v418
        %s423 = sld [smem:[#allocation8 + $0x5]]
        %v424 = vstv %s423
        %v425 = vmul.f32 %v424, %v347
        %v426 = vmul.f32 %v424, %v348
        %v427 = vmul.f32 %v424, %v349
        %v431 = vrot.slane %v425, 1
        %v432 = vrot.slane %v426, 1
        %v433 = vsel %vm392, %v431, %v432
        %v434 = vrot.slane %v427, 1
        %v435 = vsel %vm392, %v432, %v434
        %436 = vrot.lane.b32.xlu0 %v433, 126
        %v437 = vpop.permute.xlu0 %436
        %438 = vrot.lane.b32.xlu0 %v435, 126
        %v439 = vpop.permute.xlu0 %438
        %v442 = vadd.f32 %v421, %v437
        %v443 = vadd.f32 %v422, %v439
        %s444 = sld [smem:[#allocation8 + $0x6]]
        %v445 = vstv %s444
        %v446 = vmul.f32 %v445, %v347
        %v447 = vmul.f32 %v445, %v348
        %v448 = vmul.f32 %v445, %v349
        %vm452 = vcmask 1045504
        %v453 = vrot.slane %v446, 2
        %v454 = vrot.slane %v447, 2
        %v455 = vsel %vm452, %v453, %v454
        %v456 = vrot.slane %v448, 2
        %v457 = vsel %vm452, %v454, %v456
        %v460 = vadd.f32 %v442, %v455
        %v461 = vadd.f32 %v443, %v457
        %s462 = sld [smem:[#allocation8 + $0x7]]
        %v463 = vstv %s462
        %v464 = vmul.f32 %v463, %v347
        %v465 = vmul.f32 %v463, %v348
        %v466 = vmul.f32 %v463, %v349
        %v470 = vrot.slane %v464, 2
        %v471 = vrot.slane %v465, 2
        %v472 = vsel %vm452, %v470, %v471
        %v473 = vrot.slane %v466, 2
        %v474 = vsel %vm452, %v471, %v473
        %475 = vrot.lane.b32.xlu0 %v472, 127
        %v476 = vpop.permute.xlu0 %475
        %477 = vrot.lane.b32.xlu0 %v474, 127
        %v478 = vpop.permute.xlu0 %477
        %v481 = vadd.f32 %v460, %v476
        %v482 = vadd.f32 %v461, %v478
        %s483 = sld [smem:[#allocation8 + $0x8]]
        %v484 = vstv %s483
        %v485 = vmul.f32 %v484, %v347
        %v486 = vmul.f32 %v484, %v348
        %v487 = vmul.f32 %v484, %v349
        %v491 = vrot.slane %v485, 2
        %v492 = vrot.slane %v486, 2
        %v493 = vsel %vm452, %v491, %v492
        %v494 = vrot.slane %v487, 2
        %v495 = vsel %vm452, %v492, %v494
        %496 = vrot.lane.b32.xlu0 %v493, 126
        %v497 = vpop.permute.xlu0 %496
        %498 = vrot.lane.b32.xlu0 %v495, 126
        %v499 = vpop.permute.xlu0 %498
        %v502 = vadd.f32 %v481, %v497
        %v503 = vadd.f32 %v482, %v499
        %s504 = scalar_lea.vmem [#allocation2], 24
        %v505 = vld [vmem:[%s504] sm:$0xff]
        %v506 = vld [vmem:[%s504 + $0x8] sm:$0xff]
        %v507 = vld [vmem:[%s504 + $0x10] sm:$0x3]
        %s508 = sld [smem:[#allocation8 + $0x9]]
        %v509 = vstv %s508
        %v510 = vmul.f32 %v509, %v505
        %v511 = vmul.f32 %v509, %v506
        %v512 = vadd.f32 %v502, %v510
        %v513 = vadd.f32 %v503, %v511
        %s514 = sld [smem:[#allocation8 + $0xa]]
        %v515 = vstv %s514
        %v516 = vmul.f32 %v515, %v505
        %v517 = vmul.f32 %v515, %v506
        %520 = vrot.lane.b32.xlu0 %v516, 127
        %v521 = vpop.permute.xlu0 %520
        %522 = vrot.lane.b32.xlu0 %v517, 127
        %v523 = vpop.permute.xlu0 %522
        %v526 = vadd.f32 %v512, %v521
        %v527 = vadd.f32 %v513, %v523
        %s528 = sld [smem:[#allocation8 + $0xb]]
        %v529 = vstv %s528
        %v530 = vmul.f32 %v529, %v505
        %v531 = vmul.f32 %v529, %v506
        %534 = vrot.lane.b32.xlu0 %v530, 126
        %v535 = vpop.permute.xlu0 %534
        %536 = vrot.lane.b32.xlu0 %v531, 126
        %v537 = vpop.permute.xlu0 %536
        %v540 = vadd.f32 %v526, %v535
        %v541 = vadd.f32 %v527, %v537
        %s542 = sld [smem:[#allocation8 + $0xc]]
        %v543 = vstv %s542
        %v544 = vmul.f32 %v543, %v505
        %v545 = vmul.f32 %v543, %v506
        %v546 = vmul.f32 %v543, %v507
        %v550 = vrot.slane %v544, 1
        %v551 = vrot.slane %v545, 1
        %v552 = vsel %vm392, %v550, %v551
        %v553 = vrot.slane %v546, 1
        %v554 = vsel %vm392, %v551, %v553
        %v557 = vadd.f32 %v540, %v552
        %v558 = vadd.f32 %v541, %v554
        %s559 = sld [smem:[#allocation8 + $0xd]]
        %v560 = vstv %s559
        %v561 = vmul.f32 %v560, %v505
        %v562 = vmul.f32 %v560, %v506
        %v563 = vmul.f32 %v560, %v507
        %v567 = vrot.slane %v561, 1
        %v568 = vrot.slane %v562, 1
        %v569 = vsel %vm392, %v567, %v568
        %v570 = vrot.slane %v563, 1
        %v571 = vsel %vm392, %v568, %v570
        %572 = vrot.lane.b32.xlu0 %v569, 127
        %v573 = vpop.permute.xlu0 %572
        %574 = vrot.lane.b32.xlu0 %v571, 127
        %v575 = vpop.permute.xlu0 %574
        %v578 = vadd.f32 %v557, %v573
        %v579 = vadd.f32 %v558, %v575
        %s580 = sld [smem:[#allocation8 + $0xe]]
        %v581 = vstv %s580
        %v582 = vmul.f32 %v581, %v505
        %v583 = vmul.f32 %v581, %v506
        %v584 = vmul.f32 %v581, %v507
        %v588 = vrot.slane %v582, 1
        %v589 = vrot.slane %v583, 1
        %v590 = vsel %vm392, %v588, %v589
        %v591 = vrot.slane %v584, 1
        %v592 = vsel %vm392, %v589, %v591
        %593 = vrot.lane.b32.xlu0 %v590, 126
        %v594 = vpop.permute.xlu0 %593
        %595 = vrot.lane.b32.xlu0 %v592, 126
        %v596 = vpop.permute.xlu0 %595
        %v599 = vadd.f32 %v578, %v594
        %v600 = vadd.f32 %v579, %v596
        %s601 = sld [smem:[#allocation8 + $0xf]]
        %v602 = vstv %s601
        %v603 = vmul.f32 %v602, %v505
        %v604 = vmul.f32 %v602, %v506
        %v605 = vmul.f32 %v602, %v507
        %v609 = vrot.slane %v603, 2
        %v610 = vrot.slane %v604, 2
        %v611 = vsel %vm452, %v609, %v610
        %v612 = vrot.slane %v605, 2
        %v613 = vsel %vm452, %v610, %v612
        %v616 = vadd.f32 %v599, %v611
        %v617 = vadd.f32 %v600, %v613
        %s618 = sld [smem:[#allocation8 + $0x10]]
        %v619 = vstv %s618
        %v620 = vmul.f32 %v619, %v505
        %v621 = vmul.f32 %v619, %v506
        %v622 = vmul.f32 %v619, %v507
        %v626 = vrot.slane %v620, 2
        %v627 = vrot.slane %v621, 2
        %v628 = vsel %vm452, %v626, %v627
        %v629 = vrot.slane %v622, 2
        %v630 = vsel %vm452, %v627, %v629
        %631 = vrot.lane.b32.xlu0 %v628, 127
        %v632 = vpop.permute.xlu0 %631
        %633 = vrot.lane.b32.xlu0 %v630, 127
        %v634 = vpop.permute.xlu0 %633
        %v637 = vadd.f32 %v616, %v632
        %v638 = vadd.f32 %v617, %v634
        %s639 = sld [smem:[#allocation8 + $0x11]]
        %v640 = vstv %s639
        %v641 = vmul.f32 %v640, %v505
        %v642 = vmul.f32 %v640, %v506
        %v643 = vmul.f32 %v640, %v507
        %v647 = vrot.slane %v641, 2
        %v648 = vrot.slane %v642, 2
        %v649 = vsel %vm452, %v647, %v648
        %v650 = vrot.slane %v643, 2
        %v651 = vsel %vm452, %v648, %v650
        %652 = vrot.lane.b32.xlu0 %v649, 126
        %v653 = vpop.permute.xlu0 %652
        %654 = vrot.lane.b32.xlu0 %v651, 126
        %v655 = vpop.permute.xlu0 %654
        %v658 = vadd.f32 %v637, %v653
        %v659 = vadd.f32 %v638, %v655
        %s660 = scalar_lea.vmem [#allocation2], 48
        %v661 = vld [vmem:[%s660] sm:$0xff]
        %v662 = vld [vmem:[%s660 + $0x8] sm:$0xff]
        %v663 = vld [vmem:[%s660 + $0x10] sm:$0x3]
        %s664 = sld [smem:[#allocation8 + $0x12]]
        %v665 = vstv %s664
        %v666 = vmul.f32 %v665, %v661
        %v667 = vmul.f32 %v665, %v662
        %v668 = vadd.f32 %v658, %v666
        %v669 = vadd.f32 %v659, %v667
        %s670 = sld [smem:[#allocation8 + $0x13]]
        %v671 = vstv %s670
        %v672 = vmul.f32 %v671, %v661
        %v673 = vmul.f32 %v671, %v662
        %676 = vrot.lane.b32.xlu0 %v672, 127
        %v677 = vpop.permute.xlu0 %676
        %678 = vrot.lane.b32.xlu0 %v673, 127
        %v679 = vpop.permute.xlu0 %678
        %v682 = vadd.f32 %v668, %v677
        %v683 = vadd.f32 %v669, %v679
        %s684 = sld [smem:[#allocation8 + $0x14]]
        %v685 = vstv %s684
        %v686 = vmul.f32 %v685, %v661
        %v687 = vmul.f32 %v685, %v662
        %690 = vrot.lane.b32.xlu0 %v686, 126
        %v691 = vpop.permute.xlu0 %690
        %692 = vrot.lane.b32.xlu0 %v687, 126
        %v693 = vpop.permute.xlu0 %692
        %v696 = vadd.f32 %v682, %v691
        %v697 = vadd.f32 %v683, %v693
        %s698 = sld [smem:[#allocation8 + $0x15]]
        %v699 = vstv %s698
        %v700 = vmul.f32 %v699, %v661
        %v701 = vmul.f32 %v699, %v662
        %v702 = vmul.f32 %v699, %v663
        %v706 = vrot.slane %v700, 1
        %v707 = vrot.slane %v701, 1
        %v708 = vsel %vm392, %v706, %v707
        %v709 = vrot.slane %v702, 1
        %v710 = vsel %vm392, %v707, %v709
        %v713 = vadd.f32 %v696, %v708
        %v714 = vadd.f32 %v697, %v710
        %s715 = sld [smem:[#allocation8 + $0x16]]
        %v716 = vstv %s715
        %v717 = vmul.f32 %v716, %v661
        %v718 = vmul.f32 %v716, %v662
        %v719 = vmul.f32 %v716, %v663
        %v723 = vrot.slane %v717, 1
        %v724 = vrot.slane %v718, 1
        %v725 = vsel %vm392, %v723, %v724
        %v726 = vrot.slane %v719, 1
        %v727 = vsel %vm392, %v724, %v726
        %728 = vrot.lane.b32.xlu0 %v725, 127
        %v729 = vpop.permute.xlu0 %728
        %730 = vrot.lane.b32.xlu0 %v727, 127
        %v731 = vpop.permute.xlu0 %730
        %v734 = vadd.f32 %v713, %v729
        %v735 = vadd.f32 %v714, %v731
        %s736 = sld [smem:[#allocation8 + $0x17]]
        %v737 = vstv %s736
        %v738 = vmul.f32 %v737, %v661
        %v739 = vmul.f32 %v737, %v662
        %v740 = vmul.f32 %v737, %v663
        %v744 = vrot.slane %v738, 1
        %v745 = vrot.slane %v739, 1
        %v746 = vsel %vm392, %v744, %v745
        %v747 = vrot.slane %v740, 1
        %v748 = vsel %vm392, %v745, %v747
        %749 = vrot.lane.b32.xlu0 %v746, 126
        %v750 = vpop.permute.xlu0 %749
        %751 = vrot.lane.b32.xlu0 %v748, 126
        %v752 = vpop.permute.xlu0 %751
        %v755 = vadd.f32 %v734, %v750
        %v756 = vadd.f32 %v735, %v752
        %s757 = sld [smem:[#allocation8 + $0x18]]
        %v758 = vstv %s757
        %v759 = vmul.f32 %v758, %v661
        %v760 = vmul.f32 %v758, %v662
        %v761 = vmul.f32 %v758, %v663
        %v765 = vrot.slane %v759, 2
        %v766 = vrot.slane %v760, 2
        %v767 = vsel %vm452, %v765, %v766
        %v768 = vrot.slane %v761, 2
        %v769 = vsel %vm452, %v766, %v768
        %v772 = vadd.f32 %v755, %v767
        %v773 = vadd.f32 %v756, %v769
        %s774 = sld [smem:[#allocation8 + $0x19]]
        %v775 = vstv %s774
        %v776 = vmul.f32 %v775, %v661
        %v777 = vmul.f32 %v775, %v662
        %v778 = vmul.f32 %v775, %v663
        %v782 = vrot.slane %v776, 2
        %v783 = vrot.slane %v777, 2
        %v784 = vsel %vm452, %v782, %v783
        %v785 = vrot.slane %v778, 2
        %v786 = vsel %vm452, %v783, %v785
        %787 = vrot.lane.b32.xlu0 %v784, 127
        %v788 = vpop.permute.xlu0 %787
        %789 = vrot.lane.b32.xlu0 %v786, 127
        %v790 = vpop.permute.xlu0 %789
        %v793 = vadd.f32 %v772, %v788
        %v794 = vadd.f32 %v773, %v790
        %s795 = sld [smem:[#allocation8 + $0x1a]]
        %v796 = vstv %s795
        %v797 = vmul.f32 %v796, %v661
        %v798 = vmul.f32 %v796, %v662
        %v799 = vmul.f32 %v796, %v663
        %v803 = vrot.slane %v797, 2
        %v804 = vrot.slane %v798, 2
        %v805 = vsel %vm452, %v803, %v804
        %v806 = vrot.slane %v799, 2
        %v807 = vsel %vm452, %v804, %v806
        %808 = vrot.lane.b32.xlu0 %v805, 126
        %v809 = vpop.permute.xlu0 %808
        %810 = vrot.lane.b32.xlu0 %v807, 126
        %v811 = vpop.permute.xlu0 %810
        %v814 = vadd.f32 %v793, %v809
        %v815 = vadd.f32 %v794, %v811
        %s816 = scalar_lea.vmem [#allocation2], 72
        %v817 = vld [vmem:[%s816] sm:$0xff]
        %v818 = vld [vmem:[%s816 + $0x8] sm:$0xff]
        %v819 = vld [vmem:[%s816 + $0x10] sm:$0x3]
        %s820 = sld [smem:[#allocation8 + $0x1b]]
        %v821 = vstv %s820
        %v822 = vmul.f32 %v821, %v817
        %v823 = vmul.f32 %v821, %v818
        %v824 = vadd.f32 %v814, %v822
        %v825 = vadd.f32 %v815, %v823
        %s826 = sld [smem:[#allocation8 + $0x1c]]
        %v827 = vstv %s826
        %v828 = vmul.f32 %v827, %v817
        %v829 = vmul.f32 %v827, %v818
        %832 = vrot.lane.b32.xlu0 %v828, 127
        %v833 = vpop.permute.xlu0 %832
        %834 = vrot.lane.b32.xlu0 %v829, 127
        %v835 = vpop.permute.xlu0 %834
        %v838 = vadd.f32 %v824, %v833
        %v839 = vadd.f32 %v825, %v835
        %s840 = sld [smem:[#allocation8 + $0x1d]]
        %v841 = vstv %s840
        %v842 = vmul.f32 %v841, %v817
        %v843 = vmul.f32 %v841, %v818
        %846 = vrot.lane.b32.xlu0 %v842, 126
        %v847 = vpop.permute.xlu0 %846
        %848 = vrot.lane.b32.xlu0 %v843, 126
        %v849 = vpop.permute.xlu0 %848
        %v852 = vadd.f32 %v838, %v847
        %v853 = vadd.f32 %v839, %v849
        %s854 = sld [smem:[#allocation8 + $0x1e]]
        %v855 = vstv %s854
        %v856 = vmul.f32 %v855, %v817
        %v857 = vmul.f32 %v855, %v818
        %v858 = vmul.f32 %v855, %v819
        %v862 = vrot.slane %v856, 1
        %v863 = vrot.slane %v857, 1
        %v864 = vsel %vm392, %v862, %v863
        %v865 = vrot.slane %v858, 1
        %v866 = vsel %vm392, %v863, %v865
        %v869 = vadd.f32 %v852, %v864
        %v870 = vadd.f32 %v853, %v866
        %s871 = sld [smem:[#allocation8 + $0x1f]]
        %v872 = vstv %s871
        %v873 = vmul.f32 %v872, %v817
        %v874 = vmul.f32 %v872, %v818
        %v875 = vmul.f32 %v872, %v819
        %v879 = vrot.slane %v873, 1
        %v880 = vrot.slane %v874, 1
        %v881 = vsel %vm392, %v879, %v880
        %v882 = vrot.slane %v875, 1
        %v883 = vsel %vm392, %v880, %v882
        %884 = vrot.lane.b32.xlu0 %v881, 127
        %v885 = vpop.permute.xlu0 %884
        %886 = vrot.lane.b32.xlu0 %v883, 127
        %v887 = vpop.permute.xlu0 %886
        %v890 = vadd.f32 %v869, %v885
        %v891 = vadd.f32 %v870, %v887
        %s892 = sld [smem:[#allocation8 + $0x20]]
        %v893 = vstv %s892
        %v894 = vmul.f32 %v893, %v817
        %v895 = vmul.f32 %v893, %v818
        %v896 = vmul.f32 %v893, %v819
        %v900 = vrot.slane %v894, 1
        %v901 = vrot.slane %v895, 1
        %v902 = vsel %vm392, %v900, %v901
        %v903 = vrot.slane %v896, 1
        %v904 = vsel %vm392, %v901, %v903
        %905 = vrot.lane.b32.xlu0 %v902, 126
        %v906 = vpop.permute.xlu0 %905
        %907 = vrot.lane.b32.xlu0 %v904, 126
        %v908 = vpop.permute.xlu0 %907
        %v911 = vadd.f32 %v890, %v906
        %v912 = vadd.f32 %v891, %v908
        %s913 = sld [smem:[#allocation8 + $0x21]]
        %v914 = vstv %s913
        %v915 = vmul.f32 %v914, %v817
        %v916 = vmul.f32 %v914, %v818
        %v917 = vmul.f32 %v914, %v819
        %v921 = vrot.slane %v915, 2
        %v922 = vrot.slane %v916, 2
        %v923 = vsel %vm452, %v921, %v922
        %v924 = vrot.slane %v917, 2
        %v925 = vsel %vm452, %v922, %v924
        %v928 = vadd.f32 %v911, %v923
        %v929 = vadd.f32 %v912, %v925
        %s930 = sld [smem:[#allocation8 + $0x22]]
        %v931 = vstv %s930
        %v932 = vmul.f32 %v931, %v817
        %v933 = vmul.f32 %v931, %v818
        %v934 = vmul.f32 %v931, %v819
        %v938 = vrot.slane %v932, 2
        %v939 = vrot.slane %v933, 2
        %v940 = vsel %vm452, %v938, %v939
        %v941 = vrot.slane %v934, 2
        %v942 = vsel %vm452, %v939, %v941
        %943 = vrot.lane.b32.xlu0 %v940, 127
        %v944 = vpop.permute.xlu0 %943
        %945 = vrot.lane.b32.xlu0 %v942, 127
        %v946 = vpop.permute.xlu0 %945
        %v949 = vadd.f32 %v928, %v944
        %v950 = vadd.f32 %v929, %v946
        %s951 = sld [smem:[#allocation8 + $0x23]]
        %v952 = vstv %s951
        %v953 = vmul.f32 %v952, %v817
        %v954 = vmul.f32 %v952, %v818
        %v955 = vmul.f32 %v952, %v819
        %v959 = vrot.slane %v953, 2
        %v960 = vrot.slane %v954, 2
        %v961 = vsel %vm452, %v959, %v960
        %v962 = vrot.slane %v955, 2
        %v963 = vsel %vm452, %v960, %v962
        %964 = vrot.lane.b32.xlu0 %v961, 126
        %v965 = vpop.permute.xlu0 %964
        %966 = vrot.lane.b32.xlu0 %v963, 126
        %v967 = vpop.permute.xlu0 %966
        %v970 = vadd.f32 %v949, %v965
        %v971 = vadd.f32 %v950, %v967
        %s972 = sld [smem:[#allocation3]]
        %v973 = vstv %s972
        %v974 = vadd.f32 %v970, %v973
        %v975 = vadd.f32 %v971, %v973
        %v976 = vxor.u32 %v974, 2147483648
        %v977 = vxor.u32 %v975, 2147483648
        %v978 = vmul.f32 %v976, 1.442695
        %v979 = vpow.pop %v978
        %v980 = vmul.f32 %v977, 1.442695
        %v981 = vpow.pop %v980
        %v982 = vadd.f32 %v979, 1.0
        %v983 = vadd.f32 %v981, 1.0
        %v984 = vrcp.pop %v982
        %v985 = vmul.f32 %v982, %v984
        %v986 = vsub.f32 1.0, %v985
        %v987 = vmul.f32 %v984, %v986
        %v988 = vadd.f32 %v984, %v987
        %vm989 = vweird.f32 %v982
        %vm990 = vweird.f32 %v984
        %vm991 = vmor %vm989, %vm990
        %v992 = vsel %vm991, %v984, %v988
        %v993 = vand.u32 2147483647, %v982
        %vm994 = vcmp.eq.f32.partialorder %v993, 8.507059e+37
        %v995 = vand.u32 %v982, 2147483648
        %v996 = vor.u32 1.1754944e-38, %v995
        %v997 = vsel %vm994, %v996, %v992
        %v998 = vmul.f32 1.0, %v997
        %v999 = vrcp.pop %v983
        %v1000 = vmul.f32 %v983, %v999
        %v1001 = vsub.f32 1.0, %v1000
        %v1002 = vmul.f32 %v999, %v1001
        %v1003 = vadd.f32 %v999, %v1002
        %vm1004 = vweird.f32 %v983
        %vm1005 = vweird.f32 %v999
        %vm1006 = vmor %vm1004, %vm1005
        %v1007 = vsel %vm1006, %v999, %v1003
        %v1008 = vand.u32 2147483647, %v983
        %vm1009 = vcmp.eq.f32.partialorder %v1008, 8.507059e+37
        %v1010 = vand.u32 %v983, 2147483648
        %v1011 = vor.u32 1.1754944e-38, %v1010
        %v1012 = vsel %vm1009, %v1011, %v1007
        %v1013 = vmul.f32 1.0, %v1012
        %v1014 = vpack.c.bf16 %v1013, %v998
        %v1015 = vld [vmem:[%s3] sm:$0xf]
        %v1016 = vld [vmem:[%s3 + $0x4] sm:$0xf]
        %v1017 = vld [vmem:[%s3 + $0x8] sm:$0xf]
        %v1018 = vld [vmem:[%s3 + $0xc] sm:$0xf]
        %v1023 = vunpack.c.l.b16 %v1015
        %v1024 = vunpack.c.l.b16 %v1016
        %v1025 = vunpack.c.l.b16 %v1017
        %v1026 = vunpack.c.l.b16 %v1018
        %v1027 = vpack.c.b16 %v1024, %v1023
        %v1028 = vpack.c.b16 %v1026, %v1025
        %vm1029 = vcmask 130048
        %v1031 = vsel %vm1029, %v1027, 0
        %v1034 = vsel %vm1029, %v1028, 0
        %1036 = vmatpush.bf16.msra.mxu0 0
        %1037 = vmatpush.bf16.msra.mxu0 0
        %1038 = vmatpush.bf16.msra.mxu0 0
        %1039 = vmatpush.bf16.msra.mxu0 0
        %1040 = vmatpush.bf16.msra.mxu0 0
        %1041 = vmatpush.bf16.msra.mxu0 0
        %1042 = vmatpush.bf16.msra.mxu0 0
        %1043 = vmatpush.bf16.msra.mxu0 %v1014
        %1044 = vmatmul.bf16.gmra.mxu0 %v1031
        %v1045 = vpop.f32.mrf.mxu0
        %v1046 = vadd.f32 0.0, %v1045
        %v1047 = vpop.f32.mrf.mxu0
        %v1048 = vadd.f32 0.0, %v1047
        %1049 = vmatmul.bf16.gmra.mxu0 %v1034
        %v1050 = vpop.f32.mrf.mxu0
        %v1051 = vadd.f32 0.0, %v1050
        %v1052 = vpop.f32.mrf.mxu0
        %v1053 = vadd.f32 0.0, %v1052
        %1054 = vdwg.mxu0
        %v1055 = vpack.c.bf16 %v1048, %v1046
        %v1056 = vpack.c.bf16 %v1053, %v1051
        %v1057 = vld [vmem:[%s4] sm:$0xf]
        %v1058 = vld [vmem:[%s4 + $0x4] sm:$0xf]
        %v1061 = vunpack.c.l.b16 %v1057
        %v1062 = vunpack.c.l.b16 %v1058
        %v1063 = vpack.c.b16 %v1062, %v1061
        %v1066 = vsel %vm1029, %v1055, 0
        %v1069 = vsel %vm1029, %v1056, 0
        %1071 = vmatpush.bf16.msra.mxu0 0
        %1072 = vmatpush.bf16.msra.mxu0 0
        %1073 = vmatpush.bf16.msra.mxu0 0
        %1074 = vmatpush.bf16.msra.mxu0 0
        %1075 = vmatpush.bf16.msra.mxu0 0
        %1076 = vmatpush.bf16.msra.mxu0 0
        %1077 = vmatpush.bf16.msra.mxu0 0
        %1078 = vmatpush.bf16.msra.mxu0 %v1063
        %1079 = vmatmul.bf16.gmra.mxu0 %v1066
        %v1080 = vpop.f32.mrf.mxu0
        %v1081 = vadd.f32 0.0, %v1080
        %v1082 = vpop.f32.mrf.mxu0
        %v1083 = vadd.f32 0.0, %v1082
        %1084 = vmatmul.bf16.gmra.mxu0 %v1069
        %v1085 = vpop.f32.mrf.mxu0
        %v1086 = vadd.f32 0.0, %v1085
        %v1087 = vpop.f32.mrf.mxu0
        %v1088 = vadd.f32 0.0, %v1087
        %1089 = vdwg.mxu0
        %1090 = vst [vmem:[%s259] sm:$0xff] %v1081
        %1091 = vst [vmem:[%s259 + $0x8] sm:$0xff] %v1083
        %1092 = vst [vmem:[%s259 + $0x10] sm:$0xff] %v1086
        %1093 = vst [vmem:[%s259 + $0x18] sm:$0xff] %v1088
        %s1094 = sand.u32 %s142, 1
        %s1095 = scalar_lea.sflag [#allocation6], %s1094
        %s1096 = sand.u32 %s142, 1
        %s1097 = smul.addr %s1096, 32
        %s1098 = scalar_lea.vmem [#allocation9], %s1097
        // Predicated region
        $region49: #{tpu_custom_call.1} parent=39 // pred_check
          %p1099 = pneg %p152
        $region50: #{tpu_custom_call.1} parent=39 // pred_check_branch
          %1101 = sbr.rel (%p1099) target = $region52
        $region51: #{tpu_custom_call.1} parent=39 // pred_region
          %1103 = vsyncadd %s1095, 0
          %s1104 = smul.addr %s24, 4
          %s1105 = smul.addr %s1104, 8
          %s1106 = scalar_lea.hbm %s5, %s1105
          %s1107 = sshll.u32 %s1098, 4
          %s1108 = int_to_ptr.vmem [resolvable:$true] %s1107
          %s1109 = sshll.u32 %s1106, 4
          %s1110 = int_to_ptr.hbm [resolvable:$true] %s1109
          %1115 = dma.vmem_to_hbm [thread:$0]  %s1108, 512, %s1110, %s1095, 128, 128, 8
        $region52: #{tpu_custom_call.1} parent=39 // pred_fallthru
          _
      $region40: #{tpu_custom_call.1} parent=5 // pred_fallthru
        _
      %p1116 = scmp.le.s32.totalorder 2, %s19
      // Predicated region
      $region53: #{tpu_custom_call.1} parent=5 // pred_check
        %p1117 = pneg %p1116
      $region54: #{tpu_custom_call.1} parent=5 // pred_check_branch
        %1119 = sbr.rel (%p1117) target = $region56
      $region55: #{tpu_custom_call.1} parent=5 // pred_region
        %s1120 = ssub.s32 %s19, 2
        // Predicated region
        $region57: #{tpu_custom_call.1} parent=55 // pred_check
          %p1121 = pneg %p158
        $region58: #{tpu_custom_call.1} parent=55 // pred_check_branch
          %1123 = sbr.rel (%p1121) target = $region60
        $region59: #{tpu_custom_call.1} parent=55 // pred_region
          %s1124 = sand.u32 %s143, 1
          %s1125 = scalar_lea.sflag [#allocation6], %s1124
          %s1126 = sand.u32 %s143, 1
          %s1127 = smul.addr %s1126, 32
          %s1128 = scalar_lea.vmem [#allocation9], %s1127
          %1130 = dma.done %s1125, 512
        $region60: #{tpu_custom_call.1} parent=55 // pred_fallthru
          _
      $region56: #{tpu_custom_call.1} parent=5 // pred_fallthru
        _
    $region6: #{tpu_custom_call.1} parent=1 // loop_footer
      %s23 = sadd.s32 1, %s19
    $region7: #{tpu_custom_call.1} parent=1 // loop_footer_branch
      %18 = sbr.rel target = $region3
    $region8: #{tpu_custom_call.1} parent=1 // loop_exit
      _
    %1131 = vsyncpa [#allocation5], 1
    %s1132 = scalar_lea.sflag [#allocation5], 1
    %1133 = vsyncpa %s1132, 1
    %1134 = vsyncpa [#allocation6], 1
    %s1135 = scalar_lea.sflag [#allocation6], 1
    %1136 = vsyncpa %s1135, 1
    %1137 = vsyncpa [#allocation7], 1
    %s1138 = scalar_lea.sflag [#allocation7], 1
    %1139 = vsyncpa %s1138, 1

</llo_original>
